<compile_context>
chip_gen: v7x
topology: tpu7x:2x2x1
jax: 0.10.0
libtpu: 0.0.40
codegen_flags: <defaults>
</compile_context>

<pallas_src>
import jax
import jax.numpy as jnp
from jax.experimental import pallas as pl
from jax.experimental.pallas import tpu as pltpu

C_IN, C_SQ, C_OUT = 672, 168, 112
H = W = 14
HW = H * W


def se_block_kernel(s_ref, x_ref, w1_ref, b1_ref, w2_ref, b2_ref, w3_ref, o_ref):
    """Whole fused SE block in one program.

    s_ref  [1, 672]   f32   squeezed vector (x126)
    x_ref  [672, HW]  f32   feature map (x125), channel-major
    w1_ref [672, 168] bf16  conv2d43.weight^T,  b1_ref [1, 168] f32
    w2_ref [168, 672] bf16  conv2d44.weight^T,  b2_ref [1, 672] f32
    w3_ref [112, 672] bf16  conv2d45.weight ([Cout, Cin])
    o_ref  [112, HW]  f32   output, channel-major (== NCHW after reshape)
    """
    # --- squeeze/excite path (tiny matvecs: bf16 operands, f32 accumulation) ---
    s_b = s_ref[...].astype(jnp.bfloat16)                              # [1, 672]
    h = jnp.dot(s_b, w1_ref[...], preferred_element_type=jnp.float32) + b1_ref[...]
    h = jnp.maximum(h, 0.0)                                            # ReLU, [1, 168]
    g = jnp.dot(h.astype(jnp.bfloat16), w2_ref[...],
                preferred_element_type=jnp.float32) + b2_ref[...]
    g = jnp.clip(g * (1.0 / 6.0) + 0.5, 0.0, 1.0)                      # Hardsigmoid, [1, 672]

    # --- fold the gate into the (smaller) projection weight, then one big matmul ---
    wg = w3_ref[...] * g.astype(jnp.bfloat16)                          # [112, 672] bf16
    xb = x_ref[...].astype(jnp.bfloat16)                               # [672, HW]  bf16
    o_ref[...] = jnp.dot(wg, xb, preferred_element_type=jnp.float32)   # [112, HW]  f32


def se_block(x126, x125, w1t, b1, w2t, b2, w3):
    """x126: [1, C, 1, 1], x125: [1, C, H, W] (NCHW, f32). Returns [1, Cout, H, W] f32."""
    n, c, h, w = x125.shape
    assert n == 1 and c == C_IN
    hw = h * w
    cout = w3.shape[0]

    x_c_hw = x125.reshape(c, hw)   # free view (contiguous), no transpose
    s_row = x126.reshape(1, c)     # free view

    flops = 2 * cout * c * hw + 2 * c * C_SQ * 2
    bytes_accessed = (
        x_c_hw.size * x_c_hw.dtype.itemsize + s_row.size * s_row.dtype.itemsize
        + w1t.size * w1t.dtype.itemsize + b1.size * b1.dtype.itemsize
        + w2t.size * w2t.dtype.itemsize + b2.size * b2.dtype.itemsize
        + w3.size * w3.dtype.itemsize + cout * hw * 4)

    out = pl.pallas_call(
        se_block_kernel,
        out_shape=jax.ShapeDtypeStruct((cout, hw), jnp.float32),
        grid=(1,),
        in_specs=[
            pl.BlockSpec((1, c), lambda i: (0, 0)),        # s    [1, 672]   f32
            pl.BlockSpec((c, hw), lambda i: (0, 0)),       # x    [672, 196] f32
            pl.BlockSpec((c, C_SQ), lambda i: (0, 0)),     # w1t  [672, 168] bf16
            pl.BlockSpec((1, C_SQ), lambda i: (0, 0)),     # b1   [1, 168]   f32
            pl.BlockSpec((C_SQ, c), lambda i: (0, 0)),     # w2t  [168, 672] bf16
            pl.BlockSpec((1, c), lambda i: (0, 0)),        # b2   [1, 672]   f32
            pl.BlockSpec((cout, c), lambda i: (0, 0)),     # w3   [112, 672] bf16
        ],
        out_specs=pl.BlockSpec((cout, hw), lambda i: (0, 0)),
        compiler_params=pltpu.CompilerParams(
            dimension_semantics=("arbitrary",),
            vmem_limit_bytes=8 * 1024 * 1024,
        ),
        cost_estimate=pl.CostEstimate(
            flops=flops, transcendentals=0, bytes_accessed=bytes_accessed),
    )(s_row, x_c_hw, w1t, b1, w2t, b2, w3)

    # TODO(synk): output last dim is HW=196 (not 128-aligned) -> masked-store tail;
    # padding to 256 only pays if the producer/consumer carry the padded layout
    # end-to-end (an in-wrapper pad would add >1 MB HBM round trip on a mem-bound op).
    return out.reshape(1, cout, h, w)   # free view: already channel-major == NCHW


def reference_f32(x126, x125, w1t, b1, w2t, b2, w3):
    """Pure-JAX f32 reference with the original module semantics."""
    n, c, h, w = x125.shape
    s = x126.reshape(1, c)
    hdn = jnp.maximum(s @ w1t.astype(jnp.float32) + b1, 0.0)
    g = jnp.clip((hdn @ w2t.astype(jnp.float32) + b2) / 6.0 + 0.5, 0.0, 1.0)   # [1, c]
    xg = x125.reshape(c, h * w) * g.reshape(c, 1)                              # gate channels
    y = w3.astype(jnp.float32) @ xg                                            # [cout, hw]
    return y.reshape(1, w3.shape[0], h, w)


def reference_matched(x126, x125, w1t, b1, w2t, b2, w3):
    """Reference mirroring the kernel's bf16 operand choices (tight check)."""
    n, c, h, w = x125.shape
    s = x126.reshape(1, c).astype(jnp.bfloat16)
    hdn = jnp.maximum(
        jnp.dot(s, w1t, preferred_element_type=jnp.float32) + b1, 0.0)
    g = jnp.dot(hdn.astype(jnp.bfloat16), w2t,
                preferred_element_type=jnp.float32) + b2
    g = jnp.clip(g / 6.0 + 0.5, 0.0, 1.0)
    wg = w3 * g.astype(jnp.bfloat16)
    xb = x125.reshape(c, h * w).astype(jnp.bfloat16)
    y = jnp.dot(wg, xb, preferred_element_type=jnp.float32)
    return y.reshape(1, w3.shape[0], h, w)


if __name__ == "__main__":
    key = jax.random.PRNGKey(0)
    k = jax.random.split(key, 7)

    # Parameters, stored directly in the layouts/dtypes the kernel consumes
    # (one-time offline transpose + bf16 conversion of the PyTorch Conv2d weights).
    w1t = (jax.random.normal(k[0], (C_IN, C_SQ), jnp.float32) * 0.05).astype(jnp.bfloat16)
    b1 = jax.random.normal(k[1], (1, C_SQ), jnp.float32) * 0.05            # conv2d43.bias
    w2t = (jax.random.normal(k[2], (C_SQ, C_IN), jnp.float32) * 0.05).astype(jnp.bfloat16)
    b2 = jax.random.normal(k[3], (1, C_IN), jnp.float32) * 0.05            # conv2d44.bias
    w3 = (jax.random.normal(k[4], (C_OUT, C_IN), jnp.float32) * 0.05).astype(jnp.bfloat16)

    # Inputs (same shapes as the PyTorch script).
    x125 = jax.random.normal(k[5], (1, C_IN, H, W), jnp.float32)           # feature map
    x126 = jax.random.normal(k[6], (1, C_IN, 1, 1), jnp.float32)           # squeezed vector

    out = se_block(x126, x125, w1t, b1, w2t, b2, w3)
    out = jax.block_until_ready(out)
    assert out.shape == (1, C_OUT, H, W), out.shape

    ref_m = reference_matched(x126, x125, w1t, b1, w2t, b2, w3)
    ref_f = reference_f32(x126, x125, w1t, b1, w2t, b2, w3)
    assert jnp.allclose(out, ref_m, atol=2e-3, rtol=2e-3), "mismatch vs matched-precision reference"
    assert jnp.allclose(out, ref_f, atol=6e-2, rtol=6e-2), "mismatch vs f32 reference"

    print("KERNEL_OK")
</pallas_src>

<mosaic_0001>
module attributes {stable_mosaic.version = 11 : i64} {
  func.func @se_block_kernel(%arg0: i32, %arg1: memref<1x672xf32, #tpu.memory_space<vmem>>, %arg2: memref<672x196xf32, #tpu.memory_space<vmem>>, %arg3: memref<672x168xbf16, #tpu.memory_space<vmem>>, %arg4: memref<1x168xf32, #tpu.memory_space<vmem>>, %arg5: memref<168x672xbf16, #tpu.memory_space<vmem>>, %arg6: memref<1x672xf32, #tpu.memory_space<vmem>>, %arg7: memref<112x672xbf16, #tpu.memory_space<vmem>>, %arg8: memref<112x196xf32, #tpu.memory_space<vmem>>) attributes {dimension_semantics = [#tpu.dimension_semantics<arbitrary>], iteration_bounds = array<i64: 1>, scalar_prefetch = 0 : i64, scratch_operands = 0 : i64, tpu.core_type = #tpu.core_type<tc>, window_params = [{pipeline_mode = #tpu.pipeline_mode<synchronous>, transform_indices = @transform_0, window_bounds = array<i64: 1, 672>}, {pipeline_mode = #tpu.pipeline_mode<synchronous>, transform_indices = @transform_1, window_bounds = array<i64: 672, 196>}, {pipeline_mode = #tpu.pipeline_mode<synchronous>, transform_indices = @transform_2, window_bounds = array<i64: 672, 168>}, {pipeline_mode = #tpu.pipeline_mode<synchronous>, transform_indices = @transform_3, window_bounds = array<i64: 1, 168>}, {pipeline_mode = #tpu.pipeline_mode<synchronous>, transform_indices = @transform_4, window_bounds = array<i64: 168, 672>}, {pipeline_mode = #tpu.pipeline_mode<synchronous>, transform_indices = @transform_5, window_bounds = array<i64: 1, 672>}, {pipeline_mode = #tpu.pipeline_mode<synchronous>, transform_indices = @transform_6, window_bounds = array<i64: 112, 672>}, {pipeline_mode = #tpu.pipeline_mode<synchronous>, transform_indices = @transform_7, window_bounds = array<i64: 112, 196>}]} {
    %c0 = arith.constant 0 : index
    %c0_0 = arith.constant 0 : index
    %0 = vector.load %arg1[%c0, %c0_0] : memref<1x672xf32, #tpu.memory_space<vmem>>, vector<1x672xf32>
    %1 = arith.truncf %0 : vector<1x672xf32> to vector<1x672xbf16>
    %c0_1 = arith.constant 0 : index
    %c0_2 = arith.constant 0 : index
    %2 = vector.load %arg3[%c0_1, %c0_2] : memref<672x168xbf16, #tpu.memory_space<vmem>>, vector<672x168xbf16>
    %cst = arith.constant dense<0.000000e+00> : vector<1x168xf32>
    %3 = tpu.matmul %1, %2, %cst {dimension_numbers = #tpu.dot_dimension_numbers<[1], [0], [0], [1], [0, 0, 1, 1], [], []>} : vector<1x672xbf16>, vector<672x168xbf16>, vector<1x168xf32> -> vector<1x168xf32>
    %c0_3 = arith.constant 0 : index
    %c0_4 = arith.constant 0 : index
    %4 = vector.load %arg4[%c0_3, %c0_4] : memref<1x168xf32, #tpu.memory_space<vmem>>, vector<1x168xf32>
    %5 = arith.addf %3, %4 : vector<1x168xf32>
    %cst_5 = arith.constant 0.000000e+00 : f32
    %6 = vector.broadcast %cst_5 : f32 to vector<1x168xf32>
    %7 = arith.maximumf %5, %6 : vector<1x168xf32>
    %8 = arith.truncf %7 : vector<1x168xf32> to vector<1x168xbf16>
    %c0_6 = arith.constant 0 : index
    %c0_7 = arith.constant 0 : index
    %9 = vector.load %arg5[%c0_6, %c0_7] : memref<168x672xbf16, #tpu.memory_space<vmem>>, vector<168x672xbf16>
    %cst_8 = arith.constant dense<0.000000e+00> : vector<1x672xf32>
    %10 = tpu.matmul %8, %9, %cst_8 {dimension_numbers = #tpu.dot_dimension_numbers<[1], [0], [0], [1], [0, 0, 1, 1], [], []>} : vector<1x168xbf16>, vector<168x672xbf16>, vector<1x672xf32> -> vector<1x672xf32>
    %c0_9 = arith.constant 0 : index
    %c0_10 = arith.constant 0 : index
    %11 = vector.load %arg6[%c0_9, %c0_10] : memref<1x672xf32, #tpu.memory_space<vmem>>, vector<1x672xf32>
    %12 = arith.addf %10, %11 : vector<1x672xf32>
    %cst_11 = arith.constant 0.166666672 : f32
    %13 = vector.broadcast %cst_11 : f32 to vector<1x672xf32>
    %14 = arith.mulf %12, %13 : vector<1x672xf32>
    %cst_12 = arith.constant 5.000000e-01 : f32
    %15 = vector.broadcast %cst_12 : f32 to vector<1x672xf32>
    %16 = arith.addf %14, %15 : vector<1x672xf32>
    %cst_13 = arith.constant 0.000000e+00 : f32
    %cst_14 = arith.constant 1.000000e+00 : f32
    %17 = vector.broadcast %cst_13 : f32 to vector<1x672xf32>
    %18 = arith.maximumf %17, %16 : vector<1x672xf32>
    %19 = vector.broadcast %cst_14 : f32 to vector<1x672xf32>
    %20 = arith.minimumf %19, %18 : vector<1x672xf32>
    %c0_15 = arith.constant 0 : index
    %c0_16 = arith.constant 0 : index
    %21 = vector.load %arg7[%c0_15, %c0_16] : memref<112x672xbf16, #tpu.memory_space<vmem>>, vector<112x672xbf16>
    %22 = arith.truncf %20 : vector<1x672xf32> to vector<1x672xbf16>
    %23 = vector.broadcast %22 : vector<1x672xbf16> to vector<112x672xbf16>
    %24 = arith.mulf %21, %23 : vector<112x672xbf16>
    %c0_17 = arith.constant 0 : index
    %c0_18 = arith.constant 0 : index
    %25 = vector.load %arg2[%c0_17, %c0_18] : memref<672x196xf32, #tpu.memory_space<vmem>>, vector<672x196xf32>
    %26 = arith.truncf %25 : vector<672x196xf32> to vector<672x196xbf16>
    %cst_19 = arith.constant dense<0.000000e+00> : vector<112x196xf32>
    %27 = tpu.matmul %24, %26, %cst_19 {dimension_numbers = #tpu.dot_dimension_numbers<[1], [0], [0], [1], [0, 0, 1, 1], [], []>} : vector<112x672xbf16>, vector<672x196xbf16>, vector<112x196xf32> -> vector<112x196xf32>
    %c0_20 = arith.constant 0 : index
    %c0_21 = arith.constant 0 : index
    %28 = vector.load %arg8[%c0_20, %c0_21] : memref<112x196xf32, #tpu.memory_space<vmem>>, vector<112x196xf32>
    tpu.vector_store %arg8[%c0_20, %c0_21], %27 {strides = array<i32>} : memref<112x196xf32, #tpu.memory_space<vmem>>, vector<112x196xf32>,
    return
  }
  func.func @transform_0(%arg0: i32) -> (i32, i32) {
    %c0_i32 = arith.constant 0 : i32
    %c0_i32_0 = arith.constant 0 : i32
    %c0_i32_1 = arith.constant 0 : i32
    return %c0_i32, %c0_i32_0 : i32, i32
  }
  func.func @transform_1(%arg0: i32) -> (i32, i32) {
    %c0_i32 = arith.constant 0 : i32
    %c0_i32_0 = arith.constant 0 : i32
    %c0_i32_1 = arith.constant 0 : i32
    return %c0_i32, %c0_i32_0 : i32, i32
  }
  func.func @transform_2(%arg0: i32) -> (i32, i32) {
    %c0_i32 = arith.constant 0 : i32
    %c0_i32_0 = arith.constant 0 : i32
    %c0_i32_1 = arith.constant 0 : i32
    return %c0_i32, %c0_i32_0 : i32, i32
  }
  func.func @transform_3(%arg0: i32) -> (i32, i32) {
    %c0_i32 = arith.constant 0 : i32
    %c0_i32_0 = arith.constant 0 : i32
    %c0_i32_1 = arith.constant 0 : i32
    return %c0_i32, %c0_i32_0 : i32, i32
  }
  func.func @transform_4(%arg0: i32) -> (i32, i32) {
    %c0_i32 = arith.constant 0 : i32
    %c0_i32_0 = arith.constant 0 : i32
    %c0_i32_1 = arith.constant 0 : i32
    return %c0_i32, %c0_i32_0 : i32, i32
  }
  func.func @transform_5(%arg0: i32) -> (i32, i32) {
    %c0_i32 = arith.constant 0 : i32
    %c0_i32_0 = arith.constant 0 : i32
    %c0_i32_1 = arith.constant 0 : i32
    return %c0_i32, %c0_i32_0 : i32, i32
  }
  func.func @transform_6(%arg0: i32) -> (i32, i32) {
    %c0_i32 = arith.constant 0 : i32
    %c0_i32_0 = arith.constant 0 : i32
    %c0_i32_1 = arith.constant 0 : i32
    return %c0_i32, %c0_i32_0 : i32, i32
  }
  func.func @transform_7(%arg0: i32) -> (i32, i32) {
    %c0_i32 = arith.constant 0 : i32
    %c0_i32_0 = arith.constant 0 : i32
    %c0_i32_1 = arith.constant 0 : i32
    return %c0_i32, %c0_i32_0 : i32, i32
  }
}

</mosaic_0001>

<llo_original>
// kernel: tpu_custom_call.1
$region0: #{tpu_custom_call.1}
  #allocation0 [shape = 'u32[]', space=smem, size = 0x4, offset = 0x4, fixed_abs, tag = 'smem constant byte address 0x4 - core index']
  #allocation1 [shape = 'u32[144,128]{1,0:T(1,128)}', space=vmem, size = 0x12000, scoped, tag = 'internal scratch']
  %s0 = inlined_call_operand.vmem [shape: f32[1,672], index: 0, kind: input, shape index: {}]
  %s1 = inlined_call_operand.vmem [shape: f32[672,196], index: 1, kind: input, shape index: {}]
  %s2 = inlined_call_operand.vmem [shape: bf16[672,168], index: 2, kind: input, shape index: {}]
  %s3 = inlined_call_operand.vmem [shape: f32[1,168], index: 3, kind: input, shape index: {}]
  %s4 = inlined_call_operand.vmem [shape: bf16[168,672], index: 4, kind: input, shape index: {}]
  %s5 = inlined_call_operand.vmem [shape: f32[1,672], index: 5, kind: input, shape index: {}]
  %s6 = inlined_call_operand.vmem [shape: bf16[112,672], index: 6, kind: input, shape index: {}]
  %s7 = inlined_call_operand.vmem [shape: f32[112,196], index: 7, kind: output, shape index: {}]
  %s8 = sld [smem:[#allocation0]]
  $region38: #{tpu_custom_call.1} parent=0
    _
  %s10 = ssub.s32 1, %s8
  %s11 = scalar_select 0, %s10, %s8
  // Predicated region
  $region2: #{tpu_custom_call.1} parent=0 // pred_check
    _
  $region3: #{tpu_custom_call.1} parent=0 // pred_check_branch
    %13 = sbr.rel (0) target = $region5
  $region4: #{tpu_custom_call.1} parent=0 // pred_region
    _
  $region5: #{tpu_custom_call.1} parent=0 // pred_fallthru
    _
  // Predicated region
  $region6: #{tpu_custom_call.1} parent=0 // pred_check
    _
  $region7: #{tpu_custom_call.1} parent=0 // pred_check_branch
    %15 = sbr.rel (0) target = $region9
  $region8: #{tpu_custom_call.1} parent=0 // pred_region
    _
  $region9: #{tpu_custom_call.1} parent=0 // pred_fallthru
    _
  // Predicated region
  $region10: #{tpu_custom_call.1} parent=0 // pred_check
    _
  $region11: #{tpu_custom_call.1} parent=0 // pred_check_branch
    %17 = sbr.rel (0) target = $region13
  $region12: #{tpu_custom_call.1} parent=0 // pred_region
    _
  $region13: #{tpu_custom_call.1} parent=0 // pred_fallthru
    _
  // Predicated region
  $region14: #{tpu_custom_call.1} parent=0 // pred_check
    _
  $region15: #{tpu_custom_call.1} parent=0 // pred_check_branch
    %19 = sbr.rel (0) target = $region17
  $region16: #{tpu_custom_call.1} parent=0 // pred_region
    _
  $region17: #{tpu_custom_call.1} parent=0 // pred_fallthru
    _
  // Predicated region
  $region18: #{tpu_custom_call.1} parent=0 // pred_check
    _
  $region19: #{tpu_custom_call.1} parent=0 // pred_check_branch
    %21 = sbr.rel (0) target = $region21
  $region20: #{tpu_custom_call.1} parent=0 // pred_region
    _
  $region21: #{tpu_custom_call.1} parent=0 // pred_fallthru
    _
  // Predicated region
  $region22: #{tpu_custom_call.1} parent=0 // pred_check
    _
  $region23: #{tpu_custom_call.1} parent=0 // pred_check_branch
    %23 = sbr.rel (0) target = $region25
  $region24: #{tpu_custom_call.1} parent=0 // pred_region
    _
  $region25: #{tpu_custom_call.1} parent=0 // pred_fallthru
    _
  // Predicated region
  $region26: #{tpu_custom_call.1} parent=0 // pred_check
    _
  $region27: #{tpu_custom_call.1} parent=0 // pred_check_branch
    %25 = sbr.rel (0) target = $region29
  $region28: #{tpu_custom_call.1} parent=0 // pred_region
    _
  $region29: #{tpu_custom_call.1} parent=0 // pred_fallthru
    _
  %v27 = vld [vmem:[%s0] sm:$0x3f]
  %v29 = vlaneseq
  %v30 = vshrl.u32 %v29, 7
  %v31 = vsub.s32 0, %v30
  %v32 = vrot.slane %v27, %v31
  %v33 = vlaneseq
  %v34 = vshrl.u32 %v33, 7
  %v35 = vsub.s32 1, %v34
  %v36 = vrot.slane %v27, %v35
  %v37 = vlaneseq
  %v38 = vshrl.u32 %v37, 7
  %v39 = vsub.s32 2, %v38
  %v40 = vrot.slane %v27, %v39
  %v41 = vlaneseq
  %v42 = vshrl.u32 %v41, 7
  %v43 = vsub.s32 3, %v42
  %v44 = vrot.slane %v27, %v43
  %v45 = vlaneseq
  %v46 = vshrl.u32 %v45, 7
  %v47 = vsub.s32 4, %v46
  %v48 = vrot.slane %v27, %v47
  %v49 = vlaneseq
  %v50 = vshrl.u32 %v49, 7
  %v51 = vsub.s32 5, %v50
  %v52 = vrot.slane %v27, %v51
  %v59 = vpack.c.bf16 %v32, %v32
  %v60 = vpack.c.bf16 %v36, %v36
  %v61 = vpack.c.bf16 %v40, %v40
  %v62 = vpack.c.bf16 %v44, %v44
  %v63 = vpack.c.bf16 %v48, %v48
  %v64 = vpack.c.bf16 %v52, %v52
  %v65 = vld [vmem:[%s2] sm:$0xff]
  %v66 = vld [vmem:[%s2 + $0x8] sm:$0xff]
  %v67 = vld [vmem:[%s2 + $0x10] sm:$0xff]
  %v68 = vld [vmem:[%s2 + $0x18] sm:$0xff]
  %v69 = vld [vmem:[%s2 + $0x20] sm:$0xff]
  %v70 = vld [vmem:[%s2 + $0x28] sm:$0xff]
  %v71 = vld [vmem:[%s2 + $0x30] sm:$0xff]
  %v72 = vld [vmem:[%s2 + $0x38] sm:$0xff]
  %v73 = vld [vmem:[%s2 + $0x40] sm:$0xff]
  %v74 = vld [vmem:[%s2 + $0x48] sm:$0xff]
  %v75 = vld [vmem:[%s2 + $0x50] sm:$0xff]
  %v76 = vld [vmem:[%s2 + $0x58] sm:$0xff]
  %v77 = vld [vmem:[%s2 + $0x60] sm:$0xff]
  %v78 = vld [vmem:[%s2 + $0x68] sm:$0xff]
  %v79 = vld [vmem:[%s2 + $0x70] sm:$0xff]
  %v80 = vld [vmem:[%s2 + $0x78] sm:$0xff]
  %v81 = vld [vmem:[%s2 + $0x80] sm:$0xff]
  %v82 = vld [vmem:[%s2 + $0x88] sm:$0xff]
  %v83 = vld [vmem:[%s2 + $0x90] sm:$0xff]
  %v84 = vld [vmem:[%s2 + $0x98] sm:$0xff]
  %v85 = vld [vmem:[%s2 + $0xa0] sm:$0xff]
  %v86 = vld [vmem:[%s2 + $0xa8] sm:$0xff]
  %v87 = vld [vmem:[%s2 + $0xb0] sm:$0xff]
  %v88 = vld [vmem:[%s2 + $0xb8] sm:$0xff]
  %v89 = vld [vmem:[%s2 + $0xc0] sm:$0xff]
  %v90 = vld [vmem:[%s2 + $0xc8] sm:$0xff]
  %v91 = vld [vmem:[%s2 + $0xd0] sm:$0xff]
  %v92 = vld [vmem:[%s2 + $0xd8] sm:$0xff]
  %v93 = vld [vmem:[%s2 + $0xe0] sm:$0xff]
  %v94 = vld [vmem:[%s2 + $0xe8] sm:$0xff]
  %v95 = vld [vmem:[%s2 + $0xf0] sm:$0xff]
  %v96 = vld [vmem:[%s2 + $0xf8] sm:$0xff]
  %v97 = vld [vmem:[%s2 + $0x100] sm:$0xff]
  %v98 = vld [vmem:[%s2 + $0x108] sm:$0xff]
  %v99 = vld [vmem:[%s2 + $0x110] sm:$0xff]
  %v100 = vld [vmem:[%s2 + $0x118] sm:$0xff]
  %v101 = vld [vmem:[%s2 + $0x120] sm:$0xff]
  %v102 = vld [vmem:[%s2 + $0x128] sm:$0xff]
  %v103 = vld [vmem:[%s2 + $0x130] sm:$0xff]
  %v104 = vld [vmem:[%s2 + $0x138] sm:$0xff]
  %v105 = vld [vmem:[%s2 + $0x140] sm:$0xff]
  %v106 = vld [vmem:[%s2 + $0x148] sm:$0xff]
  %v107 = vld [vmem:[%s2 + $0x150] sm:$0xff]
  %v108 = vld [vmem:[%s2 + $0x158] sm:$0xff]
  %v109 = vld [vmem:[%s2 + $0x160] sm:$0xff]
  %v110 = vld [vmem:[%s2 + $0x168] sm:$0xff]
  %v111 = vld [vmem:[%s2 + $0x170] sm:$0xff]
  %v112 = vld [vmem:[%s2 + $0x178] sm:$0xff]
  %v113 = vld [vmem:[%s2 + $0x180] sm:$0xff]
  %v114 = vld [vmem:[%s2 + $0x188] sm:$0xff]
  %v115 = vld [vmem:[%s2 + $0x190] sm:$0xff]
  %v116 = vld [vmem:[%s2 + $0x198] sm:$0xff]
  %v117 = vld [vmem:[%s2 + $0x1a0] sm:$0xff]
  %v118 = vld [vmem:[%s2 + $0x1a8] sm:$0xff]
  %v119 = vld [vmem:[%s2 + $0x1b0] sm:$0xff]
  %v120 = vld [vmem:[%s2 + $0x1b8] sm:$0xff]
  %v121 = vld [vmem:[%s2 + $0x1c0] sm:$0xff]
  %v122 = vld [vmem:[%s2 + $0x1c8] sm:$0xff]
  %v123 = vld [vmem:[%s2 + $0x1d0] sm:$0xff]
  %v124 = vld [vmem:[%s2 + $0x1d8] sm:$0xff]
  %v125 = vld [vmem:[%s2 + $0x1e0] sm:$0xff]
  %v126 = vld [vmem:[%s2 + $0x1e8] sm:$0xff]
  %v127 = vld [vmem:[%s2 + $0x1f0] sm:$0xff]
  %v128 = vld [vmem:[%s2 + $0x1f8] sm:$0xff]
  %v129 = vld [vmem:[%s2 + $0x200] sm:$0xff]
  %v130 = vld [vmem:[%s2 + $0x208] sm:$0xff]
  %v131 = vld [vmem:[%s2 + $0x210] sm:$0xff]
  %v132 = vld [vmem:[%s2 + $0x218] sm:$0xff]
  %v133 = vld [vmem:[%s2 + $0x220] sm:$0xff]
  %v134 = vld [vmem:[%s2 + $0x228] sm:$0xff]
  %v135 = vld [vmem:[%s2 + $0x230] sm:$0xff]
  %v136 = vld [vmem:[%s2 + $0x238] sm:$0xff]
  %v137 = vld [vmem:[%s2 + $0x240] sm:$0xff]
  %v138 = vld [vmem:[%s2 + $0x248] sm:$0xff]
  %v139 = vld [vmem:[%s2 + $0x250] sm:$0xff]
  %v140 = vld [vmem:[%s2 + $0x258] sm:$0xff]
  %v141 = vld [vmem:[%s2 + $0x260] sm:$0xff]
  %v142 = vld [vmem:[%s2 + $0x268] sm:$0xff]
  %v143 = vld [vmem:[%s2 + $0x270] sm:$0xff]
  %v144 = vld [vmem:[%s2 + $0x278] sm:$0xff]
  %v145 = vld [vmem:[%s2 + $0x280] sm:$0xff]
  %v146 = vld [vmem:[%s2 + $0x288] sm:$0xff]
  %v147 = vld [vmem:[%s2 + $0x290] sm:$0xff]
  %v148 = vld [vmem:[%s2 + $0x298] sm:$0xff]
  %v149 = vld [vmem:[%s3] sm:$0x3]
  %v234 = vunpack.c.l.b16 %v65
  %v235 = vunpack.c.h.b16 %v65
  %v236 = vunpack.c.l.b16 %v66
  %v237 = vunpack.c.h.b16 %v66
  %v238 = vunpack.c.l.b16 %v67
  %v239 = vunpack.c.h.b16 %v67
  %v240 = vunpack.c.l.b16 %v68
  %v241 = vunpack.c.h.b16 %v68
  %v242 = vunpack.c.l.b16 %v69
  %v243 = vunpack.c.h.b16 %v69
  %v244 = vunpack.c.l.b16 %v70
  %v245 = vunpack.c.h.b16 %v70
  %v246 = vunpack.c.l.b16 %v71
  %v247 = vunpack.c.h.b16 %v71
  %v248 = vunpack.c.l.b16 %v72
  %v249 = vunpack.c.h.b16 %v72
  %v250 = vunpack.c.l.b16 %v73
  %v251 = vunpack.c.h.b16 %v73
  %v252 = vunpack.c.l.b16 %v74
  %v253 = vunpack.c.h.b16 %v74
  %v254 = vunpack.c.l.b16 %v75
  %v255 = vunpack.c.h.b16 %v75
  %v256 = vunpack.c.l.b16 %v76
  %v257 = vunpack.c.h.b16 %v76
  %v258 = vunpack.c.l.b16 %v77
  %v259 = vunpack.c.h.b16 %v77
  %v260 = vunpack.c.l.b16 %v78
  %v261 = vunpack.c.h.b16 %v78
  %v262 = vunpack.c.l.b16 %v79
  %v263 = vunpack.c.h.b16 %v79
  %v264 = vunpack.c.l.b16 %v80
  %v265 = vunpack.c.h.b16 %v80
  %v266 = vunpack.c.l.b16 %v81
  %v267 = vunpack.c.h.b16 %v81
  %v268 = vunpack.c.l.b16 %v82
  %v269 = vunpack.c.h.b16 %v82
  %v270 = vunpack.c.l.b16 %v83
  %v271 = vunpack.c.h.b16 %v83
  %v272 = vunpack.c.l.b16 %v84
  %v273 = vunpack.c.h.b16 %v84
  %v274 = vunpack.c.l.b16 %v85
  %v275 = vunpack.c.h.b16 %v85
  %v276 = vunpack.c.l.b16 %v86
  %v277 = vunpack.c.h.b16 %v86
  %v278 = vunpack.c.l.b16 %v87
  %v279 = vunpack.c.h.b16 %v87
  %v280 = vunpack.c.l.b16 %v88
  %v281 = vunpack.c.h.b16 %v88
  %v282 = vunpack.c.l.b16 %v89
  %v283 = vunpack.c.h.b16 %v89
  %v284 = vunpack.c.l.b16 %v90
  %v285 = vunpack.c.h.b16 %v90
  %v286 = vunpack.c.l.b16 %v91
  %v287 = vunpack.c.h.b16 %v91
  %v288 = vunpack.c.l.b16 %v92
  %v289 = vunpack.c.h.b16 %v92
  %v290 = vunpack.c.l.b16 %v93
  %v291 = vunpack.c.h.b16 %v93
  %v292 = vunpack.c.l.b16 %v94
  %v293 = vunpack.c.h.b16 %v94
  %v294 = vunpack.c.l.b16 %v95
  %v295 = vunpack.c.h.b16 %v95
  %v296 = vunpack.c.l.b16 %v96
  %v297 = vunpack.c.h.b16 %v96
  %v298 = vunpack.c.l.b16 %v97
  %v299 = vunpack.c.h.b16 %v97
  %v300 = vunpack.c.l.b16 %v98
  %v301 = vunpack.c.h.b16 %v98
  %v302 = vunpack.c.l.b16 %v99
  %v303 = vunpack.c.h.b16 %v99
  %v304 = vunpack.c.l.b16 %v100
  %v305 = vunpack.c.h.b16 %v100
  %v306 = vunpack.c.l.b16 %v101
  %v307 = vunpack.c.h.b16 %v101
  %v308 = vunpack.c.l.b16 %v102
  %v309 = vunpack.c.h.b16 %v102
  %v310 = vunpack.c.l.b16 %v103
  %v311 = vunpack.c.h.b16 %v103
  %v312 = vunpack.c.l.b16 %v104
  %v313 = vunpack.c.h.b16 %v104
  %v314 = vunpack.c.l.b16 %v105
  %v315 = vunpack.c.h.b16 %v105
  %v316 = vunpack.c.l.b16 %v106
  %v317 = vunpack.c.h.b16 %v106
  %v318 = vunpack.c.l.b16 %v107
  %v319 = vunpack.c.h.b16 %v107
  %v320 = vunpack.c.l.b16 %v108
  %v321 = vunpack.c.h.b16 %v108
  %v322 = vunpack.c.l.b16 %v109
  %v323 = vunpack.c.h.b16 %v109
  %v324 = vunpack.c.l.b16 %v110
  %v325 = vunpack.c.h.b16 %v110
  %v326 = vunpack.c.l.b16 %v111
  %v327 = vunpack.c.h.b16 %v111
  %v328 = vunpack.c.l.b16 %v112
  %v329 = vunpack.c.h.b16 %v112
  %v330 = vunpack.c.l.b16 %v113
  %v331 = vunpack.c.h.b16 %v113
  %v332 = vunpack.c.l.b16 %v114
  %v333 = vunpack.c.h.b16 %v114
  %v334 = vunpack.c.l.b16 %v115
  %v335 = vunpack.c.h.b16 %v115
  %v336 = vunpack.c.l.b16 %v116
  %v337 = vunpack.c.h.b16 %v116
  %v338 = vunpack.c.l.b16 %v117
  %v339 = vunpack.c.h.b16 %v117
  %v340 = vunpack.c.l.b16 %v118
  %v341 = vunpack.c.h.b16 %v118
  %v342 = vunpack.c.l.b16 %v119
  %v343 = vunpack.c.h.b16 %v119
  %v344 = vunpack.c.l.b16 %v120
  %v345 = vunpack.c.h.b16 %v120
  %v346 = vunpack.c.l.b16 %v121
  %v347 = vunpack.c.h.b16 %v121
  %v348 = vunpack.c.l.b16 %v122
  %v349 = vunpack.c.h.b16 %v122
  %v350 = vunpack.c.l.b16 %v123
  %v351 = vunpack.c.h.b16 %v123
  %v352 = vunpack.c.l.b16 %v124
  %v353 = vunpack.c.h.b16 %v124
  %v354 = vunpack.c.l.b16 %v125
  %v355 = vunpack.c.h.b16 %v125
  %v356 = vunpack.c.l.b16 %v126
  %v357 = vunpack.c.h.b16 %v126
  %v358 = vunpack.c.l.b16 %v127
  %v359 = vunpack.c.h.b16 %v127
  %v360 = vunpack.c.l.b16 %v128
  %v361 = vunpack.c.h.b16 %v128
  %v362 = vunpack.c.l.b16 %v129
  %v363 = vunpack.c.h.b16 %v129
  %v364 = vunpack.c.l.b16 %v130
  %v365 = vunpack.c.h.b16 %v130
  %v366 = vunpack.c.l.b16 %v131
  %v367 = vunpack.c.h.b16 %v131
  %v368 = vunpack.c.l.b16 %v132
  %v369 = vunpack.c.h.b16 %v132
  %v370 = vunpack.c.l.b16 %v133
  %v371 = vunpack.c.h.b16 %v133
  %v372 = vunpack.c.l.b16 %v134
  %v373 = vunpack.c.h.b16 %v134
  %v374 = vunpack.c.l.b16 %v135
  %v375 = vunpack.c.h.b16 %v135
  %v376 = vunpack.c.l.b16 %v136
  %v377 = vunpack.c.h.b16 %v136
  %v378 = vunpack.c.l.b16 %v137
  %v379 = vunpack.c.h.b16 %v137
  %v380 = vunpack.c.l.b16 %v138
  %v381 = vunpack.c.h.b16 %v138
  %v382 = vunpack.c.l.b16 %v139
  %v383 = vunpack.c.h.b16 %v139
  %v384 = vunpack.c.l.b16 %v140
  %v385 = vunpack.c.h.b16 %v140
  %v386 = vunpack.c.l.b16 %v141
  %v387 = vunpack.c.h.b16 %v141
  %v388 = vunpack.c.l.b16 %v142
  %v389 = vunpack.c.h.b16 %v142
  %v390 = vunpack.c.l.b16 %v143
  %v391 = vunpack.c.h.b16 %v143
  %v392 = vunpack.c.l.b16 %v144
  %v393 = vunpack.c.h.b16 %v144
  %v394 = vunpack.c.l.b16 %v145
  %v395 = vunpack.c.h.b16 %v145
  %v396 = vunpack.c.l.b16 %v146
  %v397 = vunpack.c.h.b16 %v146
  %v398 = vunpack.c.l.b16 %v147
  %v399 = vunpack.c.h.b16 %v147
  %v400 = vunpack.c.l.b16 %v148
  %v401 = vunpack.c.h.b16 %v148
  %v402 = vpack.c.b16 %v236, %v234
  %v403 = vpack.c.b16 %v237, %v235
  %v404 = vpack.c.b16 %v240, %v238
  %v405 = vpack.c.b16 %v241, %v239
  %v406 = vpack.c.b16 %v244, %v242
  %v407 = vpack.c.b16 %v245, %v243
  %v408 = vpack.c.b16 %v248, %v246
  %v409 = vpack.c.b16 %v249, %v247
  %v410 = vpack.c.b16 %v252, %v250
  %v411 = vpack.c.b16 %v253, %v251
  %v412 = vpack.c.b16 %v256, %v254
  %v413 = vpack.c.b16 %v257, %v255
  %v414 = vpack.c.b16 %v260, %v258
  %v415 = vpack.c.b16 %v261, %v259
  %v416 = vpack.c.b16 %v264, %v262
  %v417 = vpack.c.b16 %v265, %v263
  %v418 = vpack.c.b16 %v268, %v266
  %v419 = vpack.c.b16 %v269, %v267
  %v420 = vpack.c.b16 %v272, %v270
  %v421 = vpack.c.b16 %v273, %v271
  %v422 = vpack.c.b16 %v276, %v274
  %v423 = vpack.c.b16 %v277, %v275
  %v424 = vpack.c.b16 %v280, %v278
  %v425 = vpack.c.b16 %v281, %v279
  %v426 = vpack.c.b16 %v284, %v282
  %v427 = vpack.c.b16 %v285, %v283
  %v428 = vpack.c.b16 %v288, %v286
  %v429 = vpack.c.b16 %v289, %v287
  %v430 = vpack.c.b16 %v292, %v290
  %v431 = vpack.c.b16 %v293, %v291
  %v432 = vpack.c.b16 %v296, %v294
  %v433 = vpack.c.b16 %v297, %v295
  %v434 = vpack.c.b16 %v300, %v298
  %v435 = vpack.c.b16 %v301, %v299
  %v436 = vpack.c.b16 %v304, %v302
  %v437 = vpack.c.b16 %v305, %v303
  %v438 = vpack.c.b16 %v308, %v306
  %v439 = vpack.c.b16 %v309, %v307
  %v440 = vpack.c.b16 %v312, %v310
  %v441 = vpack.c.b16 %v313, %v311
  %v442 = vpack.c.b16 %v316, %v314
  %v443 = vpack.c.b16 %v317, %v315
  %v444 = vpack.c.b16 %v320, %v318
  %v445 = vpack.c.b16 %v321, %v319
  %v446 = vpack.c.b16 %v324, %v322
  %v447 = vpack.c.b16 %v325, %v323
  %v448 = vpack.c.b16 %v328, %v326
  %v449 = vpack.c.b16 %v329, %v327
  %v450 = vpack.c.b16 %v332, %v330
  %v451 = vpack.c.b16 %v333, %v331
  %v452 = vpack.c.b16 %v336, %v334
  %v453 = vpack.c.b16 %v337, %v335
  %v454 = vpack.c.b16 %v340, %v338
  %v455 = vpack.c.b16 %v341, %v339
  %v456 = vpack.c.b16 %v344, %v342
  %v457 = vpack.c.b16 %v345, %v343
  %v458 = vpack.c.b16 %v348, %v346
  %v459 = vpack.c.b16 %v349, %v347
  %v460 = vpack.c.b16 %v352, %v350
  %v461 = vpack.c.b16 %v353, %v351
  %v462 = vpack.c.b16 %v356, %v354
  %v463 = vpack.c.b16 %v357, %v355
  %v464 = vpack.c.b16 %v360, %v358
  %v465 = vpack.c.b16 %v361, %v359
  %v466 = vpack.c.b16 %v364, %v362
  %v467 = vpack.c.b16 %v365, %v363
  %v468 = vpack.c.b16 %v368, %v366
  %v469 = vpack.c.b16 %v369, %v367
  %v470 = vpack.c.b16 %v372, %v370
  %v471 = vpack.c.b16 %v373, %v371
  %v472 = vpack.c.b16 %v376, %v374
  %v473 = vpack.c.b16 %v377, %v375
  %v474 = vpack.c.b16 %v380, %v378
  %v475 = vpack.c.b16 %v381, %v379
  %v476 = vpack.c.b16 %v384, %v382
  %v477 = vpack.c.b16 %v385, %v383
  %v478 = vpack.c.b16 %v388, %v386
  %v479 = vpack.c.b16 %v389, %v387
  %v480 = vpack.c.b16 %v392, %v390
  %v481 = vpack.c.b16 %v393, %v391
  %v482 = vpack.c.b16 %v396, %v394
  %v483 = vpack.c.b16 %v397, %v395
  %v484 = vpack.c.b16 %v400, %v398
  %v485 = vpack.c.b16 %v401, %v399
  %v571 = vlaneseq
  %v572 = vshrl.u32 %v571, 7
  %v573 = vsub.s32 0, %v572
  %v574 = vrot.slane %v149, %v573
  %v575 = vlaneseq
  %v576 = vshrl.u32 %v575, 7
  %v577 = vsub.s32 1, %v576
  %v578 = vrot.slane %v149, %v577
  %vm581 = vcmask 261120
  %v583 = vsel %vm581, %v64, 0
  %585 = vmatprep.subr.bf16.mxu0 %v403
  %586 = vmatpush1.bf16.msra.mxu0 %v402
  %587 = vmatprep.subr.bf16.mxu0 %v405
  %588 = vmatpush1.bf16.msra.mxu0 %v404
  %589 = vmatprep.subr.bf16.mxu0 %v407
  %590 = vmatpush1.bf16.msra.mxu0 %v406
  %591 = vmatprep.subr.bf16.mxu0 %v409
  %592 = vmatpush1.bf16.msra.mxu0 %v408
  %593 = vmatprep.subr.bf16.mxu0 %v411
  %594 = vmatpush1.bf16.msra.mxu0 %v410
  %595 = vmatprep.subr.bf16.mxu0 %v413
  %596 = vmatpush1.bf16.msra.mxu0 %v412
  %597 = vmatprep.subr.bf16.mxu0 %v415
  %598 = vmatpush1.bf16.msra.mxu0 %v414
  %599 = vmatprep.subr.bf16.mxu0 %v417
  %600 = vmatpush1.bf16.msra.mxu0 %v416
  %601 = vmatprep.subr.bf16.mxu0 %v419
  %602 = vmatpush1.bf16.msra.mxu0 %v418
  %603 = vmatprep.subr.bf16.mxu0 %v421
  %604 = vmatpush1.bf16.msra.mxu0 %v420
  %605 = vmatprep.subr.bf16.mxu0 %v423
  %606 = vmatpush1.bf16.msra.mxu0 %v422
  %607 = vmatprep.subr.bf16.mxu0 %v425
  %608 = vmatpush1.bf16.msra.mxu0 %v424
  %609 = vmatprep.subr.bf16.mxu0 %v427
  %610 = vmatpush1.bf16.msra.mxu0 %v426
  %611 = vmatprep.subr.bf16.mxu0 %v429
  %612 = vmatpush1.bf16.msra.mxu0 %v428
  %613 = vmatprep.subr.bf16.mxu0 %v431
  %614 = vmatpush1.bf16.msra.mxu0 %v430
  %615 = vmatprep.subr.bf16.mxu0 %v433
  %616 = vmatpush1.bf16.msra.mxu0 %v432
  %617 = vmatprep.mubr.bf16.mxu0 %v60
  %618 = vmatmul.mubr.bf16.gmra.mrb[0].mxu0 %v59
  %v619 = vpop.f32.mrb[0].mxu0
  %v620 = vadd.f32 %v574, %v619
  %v621 = vpop.f32.mrb[0].mxu0
  %v622 = vadd.f32 %v578, %v621
  %v623 = vpop.f32.mrb[0].mxu0
  %v624 = vpop.f32.mrb[0].mxu0
  %625 = vdwg.mxu0
  %626 = vmatprep.subr.bf16.mxu0 %v435
  %627 = vmatpush1.bf16.msra.mxu0 %v434
  %628 = vmatprep.subr.bf16.mxu0 %v437
  %629 = vmatpush1.bf16.msra.mxu0 %v436
  %630 = vmatprep.subr.bf16.mxu0 %v439
  %631 = vmatpush1.bf16.msra.mxu0 %v438
  %632 = vmatprep.subr.bf16.mxu0 %v441
  %633 = vmatpush1.bf16.msra.mxu0 %v440
  %634 = vmatprep.subr.bf16.mxu0 %v443
  %635 = vmatpush1.bf16.msra.mxu0 %v442
  %636 = vmatprep.subr.bf16.mxu0 %v445
  %637 = vmatpush1.bf16.msra.mxu0 %v444
  %638 = vmatprep.subr.bf16.mxu0 %v447
  %639 = vmatpush1.bf16.msra.mxu0 %v446
  %640 = vmatprep.subr.bf16.mxu0 %v449
  %641 = vmatpush1.bf16.msra.mxu0 %v448
  %642 = vmatprep.subr.bf16.mxu0 %v451
  %643 = vmatpush1.bf16.msra.mxu0 %v450
  %644 = vmatprep.subr.bf16.mxu0 %v453
  %645 = vmatpush1.bf16.msra.mxu0 %v452
  %646 = vmatprep.subr.bf16.mxu0 %v455
  %647 = vmatpush1.bf16.msra.mxu0 %v454
  %648 = vmatprep.subr.bf16.mxu0 %v457
  %649 = vmatpush1.bf16.msra.mxu0 %v456
  %650 = vmatprep.subr.bf16.mxu0 %v459
  %651 = vmatpush1.bf16.msra.mxu0 %v458
  %652 = vmatprep.subr.bf16.mxu0 %v461
  %653 = vmatpush1.bf16.msra.mxu0 %v460
  %654 = vmatprep.subr.bf16.mxu0 %v463
  %655 = vmatpush1.bf16.msra.mxu0 %v462
  %656 = vmatprep.subr.bf16.mxu0 %v465
  %657 = vmatpush1.bf16.msra.mxu0 %v464
  %658 = vmatprep.mubr.bf16.mxu0 %v62
  %659 = vmatmul.mubr.bf16.gmra.mrb[0].mxu0 %v61
  %v660 = vpop.f32.mrb[0].mxu0
  %v661 = vadd.f32 %v620, %v660
  %v662 = vpop.f32.mrb[0].mxu0
  %v663 = vadd.f32 %v622, %v662
  %v664 = vpop.f32.mrb[0].mxu0
  %v665 = vpop.f32.mrb[0].mxu0
  %666 = vdwg.mxu0
  %667 = vmatprep.subr.bf16.mxu0 %v467
  %668 = vmatpush1.bf16.msra.mxu0 %v466
  %669 = vmatprep.subr.bf16.mxu0 %v469
  %670 = vmatpush1.bf16.msra.mxu0 %v468
  %671 = vmatprep.subr.bf16.mxu0 %v471
  %672 = vmatpush1.bf16.msra.mxu0 %v470
  %673 = vmatprep.subr.bf16.mxu0 %v473
  %674 = vmatpush1.bf16.msra.mxu0 %v472
  %675 = vmatprep.subr.bf16.mxu0 %v475
  %676 = vmatpush1.bf16.msra.mxu0 %v474
  %677 = vmatprep.subr.bf16.mxu0 %v477
  %678 = vmatpush1.bf16.msra.mxu0 %v476
  %679 = vmatprep.subr.bf16.mxu0 %v479
  %680 = vmatpush1.bf16.msra.mxu0 %v478
  %681 = vmatprep.subr.bf16.mxu0 %v481
  %682 = vmatpush1.bf16.msra.mxu0 %v480
  %683 = vmatprep.subr.bf16.mxu0 %v483
  %684 = vmatpush1.bf16.msra.mxu0 %v482
  %685 = vmatprep.subr.bf16.mxu0 %v485
  %686 = vmatpush1.bf16.msra.mxu0 %v484
  %687 = vmatprep.subr.bf16.mxu0 0
  %688 = vmatpush1.bf16.msra.mxu0 0
  %689 = vmatprep.subr.bf16.mxu0 0
  %690 = vmatpush1.bf16.msra.mxu0 0
  %691 = vmatprep.subr.bf16.mxu0 0
  %692 = vmatpush1.bf16.msra.mxu0 0
  %693 = vmatprep.subr.bf16.mxu0 0
  %694 = vmatpush1.bf16.msra.mxu0 0
  %695 = vmatprep.subr.bf16.mxu0 0
  %696 = vmatpush1.bf16.msra.mxu0 0
  %697 = vmatprep.subr.bf16.mxu0 0
  %698 = vmatpush1.bf16.msra.mxu0 0
  %699 = vmatprep.mubr.bf16.mxu0 %v583
  %700 = vmatmul.mubr.bf16.gmra.mrb[0].mxu0 %v63
  %v701 = vpop.f32.mrb[0].mxu0
  %v702 = vadd.f32 %v661, %v701
  %v703 = vpop.f32.mrb[0].mxu0
  %v704 = vadd.f32 %v663, %v703
  %v705 = vpop.f32.mrb[0].mxu0
  %v706 = vpop.f32.mrb[0].mxu0
  %707 = vdwg.mxu0
  %v708 = vmax.f32 %v702, 0.0
  %v709 = vmax.f32 %v704, 0.0
  %v710 = vpack.c.bf16 %v708, %v708
  %v711 = vpack.c.bf16 %v709, %v709
  %v712 = vld [vmem:[%s4] sm:$0xff]
  %v713 = vld [vmem:[%s4 + $0x8] sm:$0xff]
  %v714 = vld [vmem:[%s4 + $0x10] sm:$0xff]
  %v715 = vld [vmem:[%s4 + $0x18] sm:$0xff]
  %v716 = vld [vmem:[%s4 + $0x20] sm:$0xff]
  %v717 = vld [vmem:[%s4 + $0x28] sm:$0xff]
  %v718 = vld [vmem:[%s4 + $0x30] sm:$0xff]
  %v719 = vld [vmem:[%s4 + $0x38] sm:$0xff]
  %v720 = vld [vmem:[%s4 + $0x40] sm:$0xff]
  %v721 = vld [vmem:[%s4 + $0x48] sm:$0xff]
  %v722 = vld [vmem:[%s4 + $0x50] sm:$0xff]
  %v723 = vld [vmem:[%s4 + $0x58] sm:$0xff]
  %v724 = vld [vmem:[%s4 + $0x60] sm:$0xff]
  %v725 = vld [vmem:[%s4 + $0x68] sm:$0xff]
  %v726 = vld [vmem:[%s4 + $0x70] sm:$0xff]
  %v727 = vld [vmem:[%s4 + $0x78] sm:$0xff]
  %v728 = vld [vmem:[%s4 + $0x80] sm:$0xff]
  %v729 = vld [vmem:[%s4 + $0x88] sm:$0xff]
  %v730 = vld [vmem:[%s4 + $0x90] sm:$0xff]
  %v731 = vld [vmem:[%s4 + $0x98] sm:$0xff]
  %v732 = vld [vmem:[%s4 + $0xa0] sm:$0xff]
  %v733 = vld [vmem:[%s4 + $0xa8] sm:$0xff]
  %v734 = vld [vmem:[%s4 + $0xb0] sm:$0xff]
  %v735 = vld [vmem:[%s4 + $0xb8] sm:$0xff]
  %v736 = vld [vmem:[%s4 + $0xc0] sm:$0xff]
  %v737 = vld [vmem:[%s4 + $0xc8] sm:$0xff]
  %v738 = vld [vmem:[%s4 + $0xd0] sm:$0xff]
  %v739 = vld [vmem:[%s4 + $0xd8] sm:$0xff]
  %v740 = vld [vmem:[%s4 + $0xe0] sm:$0xff]
  %v741 = vld [vmem:[%s4 + $0xe8] sm:$0xff]
  %v742 = vld [vmem:[%s4 + $0xf0] sm:$0xff]
  %v743 = vld [vmem:[%s4 + $0xf8] sm:$0xff]
  %v744 = vld [vmem:[%s4 + $0x100] sm:$0xff]
  %v745 = vld [vmem:[%s4 + $0x108] sm:$0xff]
  %v746 = vld [vmem:[%s4 + $0x110] sm:$0xff]
  %v747 = vld [vmem:[%s4 + $0x118] sm:$0xff]
  %v748 = vld [vmem:[%s4 + $0x120] sm:$0xff]
  %v749 = vld [vmem:[%s4 + $0x128] sm:$0xff]
  %v750 = vld [vmem:[%s4 + $0x130] sm:$0xff]
  %v751 = vld [vmem:[%s4 + $0x138] sm:$0xff]
  %v752 = vld [vmem:[%s4 + $0x140] sm:$0xff]
  %v753 = vld [vmem:[%s4 + $0x148] sm:$0xff]
  %v754 = vld [vmem:[%s4 + $0x150] sm:$0xff]
  %v755 = vld [vmem:[%s4 + $0x158] sm:$0xff]
  %v756 = vld [vmem:[%s4 + $0x160] sm:$0xff]
  %v757 = vld [vmem:[%s4 + $0x168] sm:$0xff]
  %v758 = vld [vmem:[%s4 + $0x170] sm:$0xff]
  %v759 = vld [vmem:[%s4 + $0x178] sm:$0xff]
  %v760 = vld [vmem:[%s4 + $0x180] sm:$0xff]
  %v761 = vld [vmem:[%s4 + $0x188] sm:$0xff]
  %v762 = vld [vmem:[%s4 + $0x190] sm:$0xff]
  %v763 = vld [vmem:[%s4 + $0x198] sm:$0xff]
  %v764 = vld [vmem:[%s4 + $0x1a0] sm:$0xff]
  %v765 = vld [vmem:[%s4 + $0x1a8] sm:$0xff]
  %v766 = vld [vmem:[%s4 + $0x1b0] sm:$0xff]
  %v767 = vld [vmem:[%s4 + $0x1b8] sm:$0xff]
  %v768 = vld [vmem:[%s4 + $0x1c0] sm:$0xff]
  %v769 = vld [vmem:[%s4 + $0x1c8] sm:$0xff]
  %v770 = vld [vmem:[%s4 + $0x1d0] sm:$0xff]
  %v771 = vld [vmem:[%s4 + $0x1d8] sm:$0xff]
  %v772 = vld [vmem:[%s4 + $0x1e0] sm:$0xff]
  %v773 = vld [vmem:[%s4 + $0x1e8] sm:$0xff]
  %v774 = vld [vmem:[%s4 + $0x1f0] sm:$0xff]
  %v775 = vld [vmem:[%s5] sm:$0x3f]
  %v839 = vunpack.c.l.b16 %v712
  %v840 = vunpack.c.h.b16 %v712
  %v841 = vunpack.c.l.b16 %v713
  %v842 = vunpack.c.h.b16 %v713
  %v843 = vunpack.c.l.b16 %v714
  %v844 = vunpack.c.h.b16 %v714
  %v845 = vunpack.c.l.b16 %v715
  %v846 = vunpack.c.h.b16 %v715
  %v847 = vunpack.c.l.b16 %v716
  %v848 = vunpack.c.h.b16 %v716
  %v849 = vunpack.c.l.b16 %v717
  %v850 = vunpack.c.h.b16 %v717
  %v851 = vunpack.c.l.b16 %v718
  %v852 = vunpack.c.h.b16 %v718
  %v853 = vunpack.c.l.b16 %v719
  %v854 = vunpack.c.h.b16 %v719
  %v855 = vunpack.c.l.b16 %v720
  %v856 = vunpack.c.h.b16 %v720
  %v857 = vunpack.c.l.b16 %v721
  %v858 = vunpack.c.h.b16 %v721
  %v859 = vunpack.c.l.b16 %v722
  %v860 = vunpack.c.h.b16 %v722
  %v861 = vunpack.c.l.b16 %v723
  %v862 = vunpack.c.h.b16 %v723
  %v863 = vunpack.c.l.b16 %v724
  %v864 = vunpack.c.h.b16 %v724
  %v865 = vunpack.c.l.b16 %v725
  %v866 = vunpack.c.h.b16 %v725
  %v867 = vunpack.c.l.b16 %v726
  %v868 = vunpack.c.h.b16 %v726
  %v869 = vunpack.c.l.b16 %v727
  %v870 = vunpack.c.h.b16 %v727
  %v871 = vunpack.c.l.b16 %v728
  %v872 = vunpack.c.h.b16 %v728
  %v873 = vunpack.c.l.b16 %v729
  %v874 = vunpack.c.h.b16 %v729
  %v875 = vunpack.c.l.b16 %v730
  %v876 = vunpack.c.h.b16 %v730
  %v877 = vunpack.c.l.b16 %v731
  %v878 = vunpack.c.h.b16 %v731
  %v879 = vunpack.c.l.b16 %v732
  %v880 = vunpack.c.h.b16 %v732
  %v881 = vunpack.c.l.b16 %v733
  %v882 = vunpack.c.h.b16 %v733
  %v883 = vunpack.c.l.b16 %v734
  %v884 = vunpack.c.h.b16 %v734
  %v885 = vunpack.c.l.b16 %v735
  %v886 = vunpack.c.h.b16 %v735
  %v887 = vunpack.c.l.b16 %v736
  %v888 = vunpack.c.h.b16 %v736
  %v889 = vunpack.c.l.b16 %v737
  %v890 = vunpack.c.h.b16 %v737
  %v891 = vunpack.c.l.b16 %v738
  %v892 = vunpack.c.h.b16 %v738
  %v893 = vunpack.c.l.b16 %v739
  %v894 = vunpack.c.h.b16 %v739
  %v895 = vunpack.c.l.b16 %v740
  %v896 = vunpack.c.h.b16 %v740
  %v897 = vunpack.c.l.b16 %v741
  %v898 = vunpack.c.h.b16 %v741
  %v899 = vunpack.c.l.b16 %v742
  %v900 = vunpack.c.h.b16 %v742
  %v901 = vunpack.c.l.b16 %v743
  %v902 = vunpack.c.h.b16 %v743
  %v903 = vunpack.c.l.b16 %v744
  %v904 = vunpack.c.h.b16 %v744
  %v905 = vunpack.c.l.b16 %v745
  %v906 = vunpack.c.h.b16 %v745
  %v907 = vunpack.c.l.b16 %v746
  %v908 = vunpack.c.h.b16 %v746
  %v909 = vunpack.c.l.b16 %v747
  %v910 = vunpack.c.h.b16 %v747
  %v911 = vunpack.c.l.b16 %v748
  %v912 = vunpack.c.h.b16 %v748
  %v913 = vunpack.c.l.b16 %v749
  %v914 = vunpack.c.h.b16 %v749
  %v915 = vunpack.c.l.b16 %v750
  %v916 = vunpack.c.h.b16 %v750
  %v917 = vunpack.c.l.b16 %v751
  %v918 = vunpack.c.h.b16 %v751
  %v919 = vunpack.c.l.b16 %v752
  %v920 = vunpack.c.h.b16 %v752
  %v921 = vunpack.c.l.b16 %v753
  %v922 = vunpack.c.h.b16 %v753
  %v923 = vunpack.c.l.b16 %v754
  %v924 = vunpack.c.h.b16 %v754
  %v925 = vunpack.c.l.b16 %v755
  %v926 = vunpack.c.h.b16 %v755
  %v927 = vunpack.c.l.b16 %v756
  %v928 = vunpack.c.h.b16 %v756
  %v929 = vunpack.c.l.b16 %v757
  %v930 = vunpack.c.h.b16 %v757
  %v931 = vunpack.c.l.b16 %v758
  %v932 = vunpack.c.h.b16 %v758
  %v933 = vunpack.c.l.b16 %v759
  %v934 = vunpack.c.h.b16 %v759
  %v935 = vunpack.c.l.b16 %v760
  %v936 = vunpack.c.h.b16 %v760
  %v937 = vunpack.c.l.b16 %v761
  %v938 = vunpack.c.h.b16 %v761
  %v939 = vunpack.c.l.b16 %v762
  %v940 = vunpack.c.h.b16 %v762
  %v941 = vunpack.c.l.b16 %v763
  %v942 = vunpack.c.h.b16 %v763
  %v943 = vunpack.c.l.b16 %v764
  %v944 = vunpack.c.h.b16 %v764
  %v945 = vunpack.c.l.b16 %v765
  %v946 = vunpack.c.h.b16 %v765
  %v947 = vunpack.c.l.b16 %v766
  %v948 = vunpack.c.h.b16 %v766
  %v949 = vunpack.c.l.b16 %v767
  %v950 = vunpack.c.h.b16 %v767
  %v951 = vunpack.c.l.b16 %v768
  %v952 = vunpack.c.h.b16 %v768
  %v953 = vunpack.c.l.b16 %v769
  %v954 = vunpack.c.h.b16 %v769
  %v955 = vunpack.c.l.b16 %v770
  %v956 = vunpack.c.h.b16 %v770
  %v957 = vunpack.c.l.b16 %v771
  %v958 = vunpack.c.h.b16 %v771
  %v959 = vunpack.c.l.b16 %v772
  %v960 = vunpack.c.h.b16 %v772
  %v961 = vunpack.c.l.b16 %v773
  %v962 = vunpack.c.h.b16 %v773
  %v963 = vunpack.c.l.b16 %v774
  %v964 = vunpack.c.h.b16 %v774
  %v965 = vpack.c.b16 %v845, %v839
  %v966 = vpack.c.b16 %v846, %v840
  %v967 = vpack.c.b16 %v847, %v841
  %v968 = vpack.c.b16 %v848, %v842
  %v969 = vpack.c.b16 %v849, %v843
  %v970 = vpack.c.b16 %v850, %v844
  %v971 = vpack.c.b16 %v857, %v851
  %v972 = vpack.c.b16 %v858, %v852
  %v973 = vpack.c.b16 %v859, %v853
  %v974 = vpack.c.b16 %v860, %v854
  %v975 = vpack.c.b16 %v861, %v855
  %v976 = vpack.c.b16 %v862, %v856
  %v977 = vpack.c.b16 %v869, %v863
  %v978 = vpack.c.b16 %v870, %v864
  %v979 = vpack.c.b16 %v871, %v865
  %v980 = vpack.c.b16 %v872, %v866
  %v981 = vpack.c.b16 %v873, %v867
  %v982 = vpack.c.b16 %v874, %v868
  %v983 = vpack.c.b16 %v881, %v875
  %v984 = vpack.c.b16 %v882, %v876
  %v985 = vpack.c.b16 %v883, %v877
  %v986 = vpack.c.b16 %v884, %v878
  %v987 = vpack.c.b16 %v885, %v879
  %v988 = vpack.c.b16 %v886, %v880
  %v989 = vpack.c.b16 %v893, %v887
  %v990 = vpack.c.b16 %v894, %v888
  %v991 = vpack.c.b16 %v895, %v889
  %v992 = vpack.c.b16 %v896, %v890
  %v993 = vpack.c.b16 %v897, %v891
  %v994 = vpack.c.b16 %v898, %v892
  %v995 = vpack.c.b16 %v905, %v899
  %v996 = vpack.c.b16 %v906, %v900
  %v997 = vpack.c.b16 %v907, %v901
  %v998 = vpack.c.b16 %v908, %v902
  %v999 = vpack.c.b16 %v909, %v903
  %v1000 = vpack.c.b16 %v910, %v904
  %v1001 = vpack.c.b16 %v917, %v911
  %v1002 = vpack.c.b16 %v918, %v912
  %v1003 = vpack.c.b16 %v919, %v913
  %v1004 = vpack.c.b16 %v920, %v914
  %v1005 = vpack.c.b16 %v921, %v915
  %v1006 = vpack.c.b16 %v922, %v916
  %v1007 = vpack.c.b16 %v929, %v923
  %v1008 = vpack.c.b16 %v930, %v924
  %v1009 = vpack.c.b16 %v931, %v925
  %v1010 = vpack.c.b16 %v932, %v926
  %v1011 = vpack.c.b16 %v933, %v927
  %v1012 = vpack.c.b16 %v934, %v928
  %v1013 = vpack.c.b16 %v941, %v935
  %v1014 = vpack.c.b16 %v942, %v936
  %v1015 = vpack.c.b16 %v943, %v937
  %v1016 = vpack.c.b16 %v944, %v938
  %v1017 = vpack.c.b16 %v945, %v939
  %v1018 = vpack.c.b16 %v946, %v940
  %v1019 = vpack.c.b16 %v953, %v947
  %v1020 = vpack.c.b16 %v954, %v948
  %v1021 = vpack.c.b16 %v955, %v949
  %v1022 = vpack.c.b16 %v956, %v950
  %v1023 = vpack.c.b16 %v957, %v951
  %v1024 = vpack.c.b16 %v958, %v952
  %v1025 = vpack.c.b16 %v959, %v959
  %v1026 = vpack.c.b16 %v960, %v960
  %v1027 = vpack.c.b16 %v961, %v961
  %v1028 = vpack.c.b16 %v962, %v962
  %v1029 = vpack.c.b16 %v963, %v963
  %v1030 = vpack.c.b16 %v964, %v964
  %v1092 = vlaneseq
  %v1093 = vshrl.u32 %v1092, 7
  %v1094 = vsub.s32 0, %v1093
  %v1095 = vrot.slane %v775, %v1094
  %v1096 = vlaneseq
  %v1097 = vshrl.u32 %v1096, 7
  %v1098 = vsub.s32 1, %v1097
  %v1099 = vrot.slane %v775, %v1098
  %v1100 = vlaneseq
  %v1101 = vshrl.u32 %v1100, 7
  %v1102 = vsub.s32 2, %v1101
  %v1103 = vrot.slane %v775, %v1102
  %v1104 = vlaneseq
  %v1105 = vshrl.u32 %v1104, 7
  %v1106 = vsub.s32 3, %v1105
  %v1107 = vrot.slane %v775, %v1106
  %v1108 = vlaneseq
  %v1109 = vshrl.u32 %v1108, 7
  %v1110 = vsub.s32 4, %v1109
  %v1111 = vrot.slane %v775, %v1110
  %v1112 = vlaneseq
  %v1113 = vshrl.u32 %v1112, 7
  %v1114 = vsub.s32 5, %v1113
  %v1115 = vrot.slane %v775, %v1114
  %vm1122 = vcmask 326656
  %v1124 = vsel %vm1122, %v711, 0
  %vm1126 = vcmask 1043456
  %v1128 = vsel %vm1126, %v1025, 0
  %v1131 = vsel %vm1126, %v1026, 0
  %v1134 = vsel %vm1126, %v1027, 0
  %v1137 = vsel %vm1126, %v1028, 0
  %v1140 = vsel %vm1126, %v1029, 0
  %v1143 = vsel %vm1126, %v1030, 0
  %1145 = vmatprep.subr.bf16.mxu0 %v966
  %1146 = vmatpush1.bf16.msra.mxu0 %v965
  %1147 = vmatprep.subr.bf16.mxu0 %v972
  %1148 = vmatpush1.bf16.msra.mxu0 %v971
  %1149 = vmatprep.subr.bf16.mxu0 %v978
  %1150 = vmatpush1.bf16.msra.mxu0 %v977
  %1151 = vmatprep.subr.bf16.mxu0 %v984
  %1152 = vmatpush1.bf16.msra.mxu0 %v983
  %1153 = vmatprep.subr.bf16.mxu0 %v990
  %1154 = vmatpush1.bf16.msra.mxu0 %v989
  %1155 = vmatprep.subr.bf16.mxu0 %v996
  %1156 = vmatpush1.bf16.msra.mxu0 %v995
  %1157 = vmatprep.subr.bf16.mxu0 %v1002
  %1158 = vmatpush1.bf16.msra.mxu0 %v1001
  %1159 = vmatprep.subr.bf16.mxu0 %v1008
  %1160 = vmatpush1.bf16.msra.mxu0 %v1007
  %1161 = vmatprep.subr.bf16.mxu0 %v1014
  %1162 = vmatpush1.bf16.msra.mxu0 %v1013
  %1163 = vmatprep.subr.bf16.mxu0 %v1020
  %1164 = vmatpush1.bf16.msra.mxu0 %v1019
  %1165 = vmatprep.subr.bf16.mxu0 %v1131
  %1166 = vmatpush1.bf16.msra.mxu0 %v1128
  %1167 = vmatprep.subr.bf16.mxu0 0
  %1168 = vmatpush1.bf16.msra.mxu0 0
  %1169 = vmatprep.subr.bf16.mxu0 0
  %1170 = vmatpush1.bf16.msra.mxu0 0
  %1171 = vmatprep.subr.bf16.mxu0 0
  %1172 = vmatpush1.bf16.msra.mxu0 0
  %1173 = vmatprep.subr.bf16.mxu0 0
  %1174 = vmatpush1.bf16.msra.mxu0 0
  %1175 = vmatprep.subr.bf16.mxu0 0
  %1176 = vmatpush1.bf16.msra.mxu0 0
  %1177 = vmatprep.mubr.bf16.mxu0 %v1124
  %1178 = vmatmul.mubr.bf16.gmra.mrb[0].mxu0 %v710
  %v1179 = vpop.f32.mrb[0].mxu0
  %v1180 = vadd.f32 %v1095, %v1179
  %v1181 = vpop.f32.mrb[0].mxu0
  %v1182 = vadd.f32 %v1099, %v1181
  %v1183 = vpop.f32.mrb[0].mxu0
  %v1184 = vpop.f32.mrb[0].mxu0
  %1185 = vdwg.mxu0
  %1186 = vmatprep.subr.bf16.mxu0 %v968
  %1187 = vmatpush1.bf16.msra.mxu0 %v967
  %1188 = vmatprep.subr.bf16.mxu0 %v974
  %1189 = vmatpush1.bf16.msra.mxu0 %v973
  %1190 = vmatprep.subr.bf16.mxu0 %v980
  %1191 = vmatpush1.bf16.msra.mxu0 %v979
  %1192 = vmatprep.subr.bf16.mxu0 %v986
  %1193 = vmatpush1.bf16.msra.mxu0 %v985
  %1194 = vmatprep.subr.bf16.mxu0 %v992
  %1195 = vmatpush1.bf16.msra.mxu0 %v991
  %1196 = vmatprep.subr.bf16.mxu0 %v998
  %1197 = vmatpush1.bf16.msra.mxu0 %v997
  %1198 = vmatprep.subr.bf16.mxu0 %v1004
  %1199 = vmatpush1.bf16.msra.mxu0 %v1003
  %1200 = vmatprep.subr.bf16.mxu0 %v1010
  %1201 = vmatpush1.bf16.msra.mxu0 %v1009
  %1202 = vmatprep.subr.bf16.mxu0 %v1016
  %1203 = vmatpush1.bf16.msra.mxu0 %v1015
  %1204 = vmatprep.subr.bf16.mxu0 %v1022
  %1205 = vmatpush1.bf16.msra.mxu0 %v1021
  %1206 = vmatprep.subr.bf16.mxu0 %v1137
  %1207 = vmatpush1.bf16.msra.mxu0 %v1134
  %1208 = vmatprep.subr.bf16.mxu0 0
  %1209 = vmatpush1.bf16.msra.mxu0 0
  %1210 = vmatprep.subr.bf16.mxu0 0
  %1211 = vmatpush1.bf16.msra.mxu0 0
  %1212 = vmatprep.subr.bf16.mxu0 0
  %1213 = vmatpush1.bf16.msra.mxu0 0
  %1214 = vmatprep.subr.bf16.mxu0 0
  %1215 = vmatpush1.bf16.msra.mxu0 0
  %1216 = vmatprep.subr.bf16.mxu0 0
  %1217 = vmatpush1.bf16.msra.mxu0 0
  %1218 = vmatprep.mubr.bf16.mxu0 %v1124
  %1219 = vmatmul.mubr.bf16.gmra.mrb[0].mxu0 %v710
  %v1220 = vpop.f32.mrb[0].mxu0
  %v1221 = vadd.f32 %v1103, %v1220
  %v1222 = vpop.f32.mrb[0].mxu0
  %v1223 = vadd.f32 %v1107, %v1222
  %v1224 = vpop.f32.mrb[0].mxu0
  %v1225 = vpop.f32.mrb[0].mxu0
  %1226 = vdwg.mxu0
  %1227 = vmatprep.subr.bf16.mxu0 %v970
  %1228 = vmatpush1.bf16.msra.mxu0 %v969
  %1229 = vmatprep.subr.bf16.mxu0 %v976
  %1230 = vmatpush1.bf16.msra.mxu0 %v975
  %1231 = vmatprep.subr.bf16.mxu0 %v982
  %1232 = vmatpush1.bf16.msra.mxu0 %v981
  %1233 = vmatprep.subr.bf16.mxu0 %v988
  %1234 = vmatpush1.bf16.msra.mxu0 %v987
  %1235 = vmatprep.subr.bf16.mxu0 %v994
  %1236 = vmatpush1.bf16.msra.mxu0 %v993
  %1237 = vmatprep.subr.bf16.mxu0 %v1000
  %1238 = vmatpush1.bf16.msra.mxu0 %v999
  %1239 = vmatprep.subr.bf16.mxu0 %v1006
  %1240 = vmatpush1.bf16.msra.mxu0 %v1005
  %1241 = vmatprep.subr.bf16.mxu0 %v1012
  %1242 = vmatpush1.bf16.msra.mxu0 %v1011
  %1243 = vmatprep.subr.bf16.mxu0 %v1018
  %1244 = vmatpush1.bf16.msra.mxu0 %v1017
  %1245 = vmatprep.subr.bf16.mxu0 %v1024
  %1246 = vmatpush1.bf16.msra.mxu0 %v1023
  %1247 = vmatprep.subr.bf16.mxu0 %v1143
  %1248 = vmatpush1.bf16.msra.mxu0 %v1140
  %1249 = vmatprep.subr.bf16.mxu0 0
  %1250 = vmatpush1.bf16.msra.mxu0 0
  %1251 = vmatprep.subr.bf16.mxu0 0
  %1252 = vmatpush1.bf16.msra.mxu0 0
  %1253 = vmatprep.subr.bf16.mxu0 0
  %1254 = vmatpush1.bf16.msra.mxu0 0
  %1255 = vmatprep.subr.bf16.mxu0 0
  %1256 = vmatpush1.bf16.msra.mxu0 0
  %1257 = vmatprep.subr.bf16.mxu0 0
  %1258 = vmatpush1.bf16.msra.mxu0 0
  %1259 = vmatprep.mubr.bf16.mxu0 %v1124
  %1260 = vmatmul.mubr.bf16.gmra.mrb[0].mxu0 %v710
  %v1261 = vpop.f32.mrb[0].mxu0
  %v1262 = vadd.f32 %v1111, %v1261
  %v1263 = vpop.f32.mrb[0].mxu0
  %v1264 = vadd.f32 %v1115, %v1263
  %v1265 = vpop.f32.mrb[0].mxu0
  %v1266 = vpop.f32.mrb[0].mxu0
  %1267 = vdwg.mxu0
  %v1268 = vmul.f32 %v1180, 0.16666667
  %v1269 = vmul.f32 %v1182, 0.16666667
  %v1270 = vmul.f32 %v1221, 0.16666667
  %v1271 = vmul.f32 %v1223, 0.16666667
  %v1272 = vmul.f32 %v1262, 0.16666667
  %v1273 = vmul.f32 %v1264, 0.16666667
  %v1274 = vadd.f32 %v1268, 0.5
  %v1275 = vadd.f32 %v1269, 0.5
  %v1276 = vadd.f32 %v1270, 0.5
  %v1277 = vadd.f32 %v1271, 0.5
  %v1278 = vadd.f32 %v1272, 0.5
  %v1279 = vadd.f32 %v1273, 0.5
  %v1280 = vmax.f32 %v1274, 0.0
  %v1281 = vmax.f32 %v1275, 0.0
  %v1282 = vmax.f32 %v1276, 0.0
  %v1283 = vmax.f32 %v1277, 0.0
  %v1284 = vmax.f32 %v1278, 0.0
  %v1285 = vmax.f32 %v1279, 0.0
  %v1286 = vmin.f32 %v1280, 1.0
  %v1287 = vmin.f32 %v1281, 1.0
  %v1288 = vmin.f32 %v1282, 1.0
  %v1289 = vmin.f32 %v1283, 1.0
  %v1290 = vmin.f32 %v1284, 1.0
  %v1291 = vmin.f32 %v1285, 1.0
  %v1292 = vld [vmem:[%s6] sm:$0xff]
  %v1293 = vld [vmem:[%s6 + $0x8] sm:$0xff]
  %v1294 = vld [vmem:[%s6 + $0x10] sm:$0xff]
  %v1295 = vld [vmem:[%s6 + $0x18] sm:$0xff]
  %v1296 = vld [vmem:[%s6 + $0x20] sm:$0xff]
  %v1297 = vld [vmem:[%s6 + $0x28] sm:$0xff]
  %v1298 = vld [vmem:[%s6 + $0x30] sm:$0xff]
  %v1299 = vld [vmem:[%s6 + $0x38] sm:$0xff]
  %v1300 = vld [vmem:[%s6 + $0x40] sm:$0xff]
  %v1301 = vld [vmem:[%s6 + $0x48] sm:$0xff]
  %v1302 = vld [vmem:[%s6 + $0x50] sm:$0xff]
  %v1303 = vld [vmem:[%s6 + $0x58] sm:$0xff]
  %v1304 = vld [vmem:[%s6 + $0x60] sm:$0xff]
  %v1305 = vld [vmem:[%s6 + $0x68] sm:$0xff]
  %v1306 = vld [vmem:[%s6 + $0x70] sm:$0xff]
  %v1307 = vld [vmem:[%s6 + $0x78] sm:$0xff]
  %v1308 = vld [vmem:[%s6 + $0x80] sm:$0xff]
  %v1309 = vld [vmem:[%s6 + $0x88] sm:$0xff]
  %v1310 = vld [vmem:[%s6 + $0x90] sm:$0xff]
  %v1311 = vld [vmem:[%s6 + $0x98] sm:$0xff]
  %v1312 = vld [vmem:[%s6 + $0xa0] sm:$0xff]
  %v1313 = vld [vmem:[%s6 + $0xa8] sm:$0xff]
  %v1314 = vld [vmem:[%s6 + $0xb0] sm:$0xff]
  %v1315 = vld [vmem:[%s6 + $0xb8] sm:$0xff]
  %v1316 = vld [vmem:[%s6 + $0xc0] sm:$0xff]
  %v1317 = vld [vmem:[%s6 + $0xc8] sm:$0xff]
  %v1318 = vld [vmem:[%s6 + $0xd0] sm:$0xff]
  %v1319 = vld [vmem:[%s6 + $0xd8] sm:$0xff]
  %v1320 = vld [vmem:[%s6 + $0xe0] sm:$0xff]
  %v1321 = vld [vmem:[%s6 + $0xe8] sm:$0xff]
  %v1322 = vld [vmem:[%s6 + $0xf0] sm:$0xff]
  %v1323 = vld [vmem:[%s6 + $0xf8] sm:$0xff]
  %v1324 = vld [vmem:[%s6 + $0x100] sm:$0xff]
  %v1325 = vld [vmem:[%s6 + $0x108] sm:$0xff]
  %v1326 = vld [vmem:[%s6 + $0x110] sm:$0xff]
  %v1327 = vld [vmem:[%s6 + $0x118] sm:$0xff]
  %v1328 = vld [vmem:[%s6 + $0x120] sm:$0xff]
  %v1329 = vld [vmem:[%s6 + $0x128] sm:$0xff]
  %v1330 = vld [vmem:[%s6 + $0x130] sm:$0xff]
  %v1331 = vld [vmem:[%s6 + $0x138] sm:$0xff]
  %v1332 = vld [vmem:[%s6 + $0x140] sm:$0xff]
  %v1333 = vld [vmem:[%s6 + $0x148] sm:$0xff]
  %v1334 = vpack.c.bf16 %v1286, %v1286
  %v1335 = vpack.c.bf16 %v1287, %v1287
  %v1336 = vpack.c.bf16 %v1288, %v1288
  %v1337 = vpack.c.bf16 %v1289, %v1289
  %v1338 = vpack.c.bf16 %v1290, %v1290
  %v1339 = vpack.c.bf16 %v1291, %v1291
  %v1341 = vpack.i.b16 %v1334, %v1334
  %v1343 = vlaneseq
  %v1344 = vshrl.u32 %v1343, 7
  %v1345 = vsub.s32 0, %v1344
  %v1346 = vrot.slane %v1341, %v1345
  %v1348 = vpack.i.b16 %v1335, %v1335
  %v1350 = vlaneseq
  %v1351 = vshrl.u32 %v1350, 7
  %v1352 = vsub.s32 0, %v1351
  %v1353 = vrot.slane %v1348, %v1352
  %v1355 = vpack.i.b16 %v1336, %v1336
  %v1357 = vlaneseq
  %v1358 = vshrl.u32 %v1357, 7
  %v1359 = vsub.s32 0, %v1358
  %v1360 = vrot.slane %v1355, %v1359
  %v1362 = vpack.i.b16 %v1337, %v1337
  %v1364 = vlaneseq
  %v1365 = vshrl.u32 %v1364, 7
  %v1366 = vsub.s32 0, %v1365
  %v1367 = vrot.slane %v1362, %v1366
  %v1369 = vpack.i.b16 %v1338, %v1338
  %v1371 = vlaneseq
  %v1372 = vshrl.u32 %v1371, 7
  %v1373 = vsub.s32 0, %v1372
  %v1374 = vrot.slane %v1369, %v1373
  %v1376 = vpack.i.b16 %v1339, %v1339
  %v1378 = vlaneseq
  %v1379 = vshrl.u32 %v1378, 7
  %v1380 = vsub.s32 0, %v1379
  %v1381 = vrot.slane %v1376, %v1380
  %v1388 = vunpack.c.l.b16 %v1346
  %v1389 = vunpack.c.l.b16 %v1353
  %v1390 = vunpack.c.l.b16 %v1360
  %v1391 = vunpack.c.l.b16 %v1367
  %v1392 = vunpack.c.l.b16 %v1374
  %v1393 = vunpack.c.l.b16 %v1381
  %v1394 = vpack.c.b16 %v1389, %v1388
  %v1395 = vpack.c.b16 %v1391, %v1390
  %v1396 = vpack.c.b16 %v1393, %v1392
  %v1400 = vmul.bf16 %v1292, %v1394
  %v1401 = vmul.bf16 %v1293, %v1395
  %v1402 = vmul.bf16 %v1294, %v1396
  %v1403 = vmul.bf16 %v1295, %v1394
  %v1404 = vmul.bf16 %v1296, %v1395
  %v1405 = vmul.bf16 %v1297, %v1396
  %v1406 = vmul.bf16 %v1298, %v1394
  %v1407 = vmul.bf16 %v1299, %v1395
  %v1408 = vmul.bf16 %v1300, %v1396
  %v1409 = vmul.bf16 %v1301, %v1394
  %v1410 = vmul.bf16 %v1302, %v1395
  %v1411 = vmul.bf16 %v1303, %v1396
  %v1412 = vmul.bf16 %v1304, %v1394
  %v1413 = vmul.bf16 %v1305, %v1395
  %v1414 = vmul.bf16 %v1306, %v1396
  %v1415 = vmul.bf16 %v1307, %v1394
  %v1416 = vmul.bf16 %v1308, %v1395
  %v1417 = vmul.bf16 %v1309, %v1396
  %v1418 = vmul.bf16 %v1310, %v1394
  %v1419 = vmul.bf16 %v1311, %v1395
  %v1420 = vmul.bf16 %v1312, %v1396
  %v1421 = vmul.bf16 %v1313, %v1394
  %v1422 = vmul.bf16 %v1314, %v1395
  %v1423 = vmul.bf16 %v1315, %v1396
  %v1424 = vmul.bf16 %v1316, %v1394
  %v1425 = vmul.bf16 %v1317, %v1395
  %v1426 = vmul.bf16 %v1318, %v1396
  %v1427 = vmul.bf16 %v1319, %v1394
  %v1428 = vmul.bf16 %v1320, %v1395
  %v1429 = vmul.bf16 %v1321, %v1396
  %v1430 = vmul.bf16 %v1322, %v1394
  %v1431 = vmul.bf16 %v1323, %v1395
  %v1432 = vmul.bf16 %v1324, %v1396
  %v1433 = vmul.bf16 %v1325, %v1394
  %v1434 = vmul.bf16 %v1326, %v1395
  %v1435 = vmul.bf16 %v1327, %v1396
  %v1436 = vmul.bf16 %v1328, %v1394
  %v1437 = vmul.bf16 %v1329, %v1395
  %v1438 = vmul.bf16 %v1330, %v1396
  %v1439 = vmul.bf16 %v1331, %v1394
  %v1440 = vmul.bf16 %v1332, %v1395
  %v1441 = vmul.bf16 %v1333, %v1396
  %v1442 = vld [vmem:[%s1] sm:$0xff]
  %v1443 = vld [vmem:[%s1 + $0x8] sm:$0xff]
  %v1444 = vld [vmem:[%s1 + $0x10] sm:$0xff]
  %v1445 = vld [vmem:[%s1 + $0x18] sm:$0xff]
  %v1446 = vld [vmem:[%s1 + $0x20] sm:$0xff]
  %v1447 = vld [vmem:[%s1 + $0x28] sm:$0xff]
  %v1448 = vld [vmem:[%s1 + $0x30] sm:$0xff]
  %v1449 = vld [vmem:[%s1 + $0x38] sm:$0xff]
  %v1450 = vld [vmem:[%s1 + $0x40] sm:$0xff]
  %v1451 = vld [vmem:[%s1 + $0x48] sm:$0xff]
  %v1452 = vld [vmem:[%s1 + $0x50] sm:$0xff]
  %v1453 = vld [vmem:[%s1 + $0x58] sm:$0xff]
  %v1454 = vld [vmem:[%s1 + $0x60] sm:$0xff]
  %v1455 = vld [vmem:[%s1 + $0x68] sm:$0xff]
  %v1456 = vld [vmem:[%s1 + $0x70] sm:$0xff]
  %v1457 = vld [vmem:[%s1 + $0x78] sm:$0xff]
  %v1458 = vld [vmem:[%s1 + $0x80] sm:$0xff]
  %v1459 = vld [vmem:[%s1 + $0x88] sm:$0xff]
  %v1460 = vld [vmem:[%s1 + $0x90] sm:$0xff]
  %v1461 = vld [vmem:[%s1 + $0x98] sm:$0xff]
  %v1462 = vld [vmem:[%s1 + $0xa0] sm:$0xff]
  %v1463 = vld [vmem:[%s1 + $0xa8] sm:$0xff]
  %v1464 = vld [vmem:[%s1 + $0xb0] sm:$0xff]
  %v1465 = vld [vmem:[%s1 + $0xb8] sm:$0xff]
  %v1466 = vld [vmem:[%s1 + $0xc0] sm:$0xff]
  %v1467 = vld [vmem:[%s1 + $0xc8] sm:$0xff]
  %v1468 = vld [vmem:[%s1 + $0xd0] sm:$0xff]
  %v1469 = vld [vmem:[%s1 + $0xd8] sm:$0xff]
  %v1470 = vld [vmem:[%s1 + $0xe0] sm:$0xff]
  %v1471 = vld [vmem:[%s1 + $0xe8] sm:$0xff]
  %v1472 = vld [vmem:[%s1 + $0xf0] sm:$0xff]
  %v1473 = vld [vmem:[%s1 + $0xf8] sm:$0xff]
  %v1474 = vld [vmem:[%s1 + $0x100] sm:$0xff]
  %v1475 = vld [vmem:[%s1 + $0x108] sm:$0xff]
  %v1476 = vld [vmem:[%s1 + $0x110] sm:$0xff]
  %v1477 = vld [vmem:[%s1 + $0x118] sm:$0xff]
  %v1478 = vld [vmem:[%s1 + $0x120] sm:$0xff]
  %v1479 = vld [vmem:[%s1 + $0x128] sm:$0xff]
  %v1480 = vld [vmem:[%s1 + $0x130] sm:$0xff]
  %v1481 = vld [vmem:[%s1 + $0x138] sm:$0xff]
  %v1482 = vld [vmem:[%s1 + $0x140] sm:$0xff]
  %v1483 = vld [vmem:[%s1 + $0x148] sm:$0xff]
  %v1484 = vld [vmem:[%s1 + $0x150] sm:$0xff]
  %v1485 = vld [vmem:[%s1 + $0x158] sm:$0xff]
  %v1486 = vld [vmem:[%s1 + $0x160] sm:$0xff]
  %v1487 = vld [vmem:[%s1 + $0x168] sm:$0xff]
  %v1488 = vld [vmem:[%s1 + $0x170] sm:$0xff]
  %v1489 = vld [vmem:[%s1 + $0x178] sm:$0xff]
  %v1490 = vld [vmem:[%s1 + $0x180] sm:$0xff]
  %v1491 = vld [vmem:[%s1 + $0x188] sm:$0xff]
  %v1492 = vld [vmem:[%s1 + $0x190] sm:$0xff]
  %v1493 = vld [vmem:[%s1 + $0x198] sm:$0xff]
  %v1494 = vld [vmem:[%s1 + $0x1a0] sm:$0xff]
  %v1495 = vld [vmem:[%s1 + $0x1a8] sm:$0xff]
  %v1496 = vld [vmem:[%s1 + $0x1b0] sm:$0xff]
  %v1497 = vld [vmem:[%s1 + $0x1b8] sm:$0xff]
  %v1498 = vld [vmem:[%s1 + $0x1c0] sm:$0xff]
  %v1499 = vld [vmem:[%s1 + $0x1c8] sm:$0xff]
  %v1500 = vld [vmem:[%s1 + $0x1d0] sm:$0xff]
  %v1501 = vld [vmem:[%s1 + $0x1d8] sm:$0xff]
  %v1502 = vld [vmem:[%s1 + $0x1e0] sm:$0xff]
  %v1503 = vld [vmem:[%s1 + $0x1e8] sm:$0xff]
  %v1504 = vld [vmem:[%s1 + $0x1f0] sm:$0xff]
  %v1505 = vld [vmem:[%s1 + $0x1f8] sm:$0xff]
  %v1506 = vld [vmem:[%s1 + $0x200] sm:$0xff]
  %v1507 = vld [vmem:[%s1 + $0x208] sm:$0xff]
  %v1508 = vld [vmem:[%s1 + $0x210] sm:$0xff]
  %v1509 = vld [vmem:[%s1 + $0x218] sm:$0xff]
  %v1510 = vld [vmem:[%s1 + $0x220] sm:$0xff]
  %v1511 = vld [vmem:[%s1 + $0x228] sm:$0xff]
  %v1512 = vld [vmem:[%s1 + $0x230] sm:$0xff]
  %v1513 = vld [vmem:[%s1 + $0x238] sm:$0xff]
  %v1514 = vld [vmem:[%s1 + $0x240] sm:$0xff]
  %v1515 = vld [vmem:[%s1 + $0x248] sm:$0xff]
  %v1516 = vld [vmem:[%s1 + $0x250] sm:$0xff]
  %v1517 = vld [vmem:[%s1 + $0x258] sm:$0xff]
  %v1518 = vld [vmem:[%s1 + $0x260] sm:$0xff]
  %v1519 = vld [vmem:[%s1 + $0x268] sm:$0xff]
  %v1520 = vld [vmem:[%s1 + $0x270] sm:$0xff]
  %v1521 = vld [vmem:[%s1 + $0x278] sm:$0xff]
  %v1522 = vld [vmem:[%s1 + $0x280] sm:$0xff]
  %v1523 = vld [vmem:[%s1 + $0x288] sm:$0xff]
  %v1524 = vld [vmem:[%s1 + $0x290] sm:$0xff]
  %v1525 = vld [vmem:[%s1 + $0x298] sm:$0xff]
  %v1526 = vld [vmem:[%s1 + $0x2a0] sm:$0xff]
  %v1527 = vld [vmem:[%s1 + $0x2a8] sm:$0xff]
  %v1528 = vld [vmem:[%s1 + $0x2b0] sm:$0xff]
  %v1529 = vld [vmem:[%s1 + $0x2b8] sm:$0xff]
  %v1530 = vld [vmem:[%s1 + $0x2c0] sm:$0xff]
  %v1531 = vld [vmem:[%s1 + $0x2c8] sm:$0xff]
  %v1532 = vld [vmem:[%s1 + $0x2d0] sm:$0xff]
  %v1533 = vld [vmem:[%s1 + $0x2d8] sm:$0xff]
  %v1534 = vld [vmem:[%s1 + $0x2e0] sm:$0xff]
  %v1535 = vld [vmem:[%s1 + $0x2e8] sm:$0xff]
  %v1536 = vld [vmem:[%s1 + $0x2f0] sm:$0xff]
  %v1537 = vld [vmem:[%s1 + $0x2f8] sm:$0xff]
  %v1538 = vld [vmem:[%s1 + $0x300] sm:$0xff]
  %v1539 = vld [vmem:[%s1 + $0x308] sm:$0xff]
  %v1540 = vld [vmem:[%s1 + $0x310] sm:$0xff]
  %v1541 = vld [vmem:[%s1 + $0x318] sm:$0xff]
  %v1542 = vld [vmem:[%s1 + $0x320] sm:$0xff]
  %v1543 = vld [vmem:[%s1 + $0x328] sm:$0xff]
  %v1544 = vld [vmem:[%s1 + $0x330] sm:$0xff]
  %v1545 = vld [vmem:[%s1 + $0x338] sm:$0xff]
  %v1546 = vld [vmem:[%s1 + $0x340] sm:$0xff]
  %v1547 = vld [vmem:[%s1 + $0x348] sm:$0xff]
  %v1548 = vld [vmem:[%s1 + $0x350] sm:$0xff]
  %v1549 = vld [vmem:[%s1 + $0x358] sm:$0xff]
  %v1550 = vld [vmem:[%s1 + $0x360] sm:$0xff]
  %v1551 = vld [vmem:[%s1 + $0x368] sm:$0xff]
  %v1552 = vld [vmem:[%s1 + $0x370] sm:$0xff]
  %v1553 = vld [vmem:[%s1 + $0x378] sm:$0xff]
  %v1554 = vld [vmem:[%s1 + $0x380] sm:$0xff]
  %v1555 = vld [vmem:[%s1 + $0x388] sm:$0xff]
  %v1556 = vld [vmem:[%s1 + $0x390] sm:$0xff]
  %v1557 = vld [vmem:[%s1 + $0x398] sm:$0xff]
  %v1558 = vld [vmem:[%s1 + $0x3a0] sm:$0xff]
  %v1559 = vld [vmem:[%s1 + $0x3a8] sm:$0xff]
  %v1560 = vld [vmem:[%s1 + $0x3b0] sm:$0xff]
  %v1561 = vld [vmem:[%s1 + $0x3b8] sm:$0xff]
  %v1562 = vld [vmem:[%s1 + $0x3c0] sm:$0xff]
  %v1563 = vld [vmem:[%s1 + $0x3c8] sm:$0xff]
  %v1564 = vld [vmem:[%s1 + $0x3d0] sm:$0xff]
  %v1565 = vld [vmem:[%s1 + $0x3d8] sm:$0xff]
  %v1566 = vld [vmem:[%s1 + $0x3e0] sm:$0xff]
  %v1567 = vld [vmem:[%s1 + $0x3e8] sm:$0xff]
  %v1568 = vld [vmem:[%s1 + $0x3f0] sm:$0xff]
  %v1569 = vld [vmem:[%s1 + $0x3f8] sm:$0xff]
  %v1570 = vld [vmem:[%s1 + $0x400] sm:$0xff]
  %v1571 = vld [vmem:[%s1 + $0x408] sm:$0xff]
  %v1572 = vld [vmem:[%s1 + $0x410] sm:$0xff]
  %v1573 = vld [vmem:[%s1 + $0x418] sm:$0xff]
  %v1574 = vld [vmem:[%s1 + $0x420] sm:$0xff]
  %v1575 = vld [vmem:[%s1 + $0x428] sm:$0xff]
  %v1576 = vld [vmem:[%s1 + $0x430] sm:$0xff]
  %v1577 = vld [vmem:[%s1 + $0x438] sm:$0xff]
  %v1578 = vld [vmem:[%s1 + $0x440] sm:$0xff]
  %v1579 = vld [vmem:[%s1 + $0x448] sm:$0xff]
  %v1580 = vld [vmem:[%s1 + $0x450] sm:$0xff]
  %v1581 = vld [vmem:[%s1 + $0x458] sm:$0xff]
  %v1582 = vld [vmem:[%s1 + $0x460] sm:$0xff]
  %v1583 = vld [vmem:[%s1 + $0x468] sm:$0xff]
  %v1584 = vld [vmem:[%s1 + $0x470] sm:$0xff]
  %v1585 = vld [vmem:[%s1 + $0x478] sm:$0xff]
  %v1586 = vld [vmem:[%s1 + $0x480] sm:$0xff]
  %v1587 = vld [vmem:[%s1 + $0x488] sm:$0xff]
  %v1588 = vld [vmem:[%s1 + $0x490] sm:$0xff]
  %v1589 = vld [vmem:[%s1 + $0x498] sm:$0xff]
  %v1590 = vld [vmem:[%s1 + $0x4a0] sm:$0xff]
  %v1591 = vld [vmem:[%s1 + $0x4a8] sm:$0xff]
  %v1592 = vld [vmem:[%s1 + $0x4b0] sm:$0xff]
  %v1593 = vld [vmem:[%s1 + $0x4b8] sm:$0xff]
  %v1594 = vld [vmem:[%s1 + $0x4c0] sm:$0xff]
  %v1595 = vld [vmem:[%s1 + $0x4c8] sm:$0xff]
  %v1596 = vld [vmem:[%s1 + $0x4d0] sm:$0xff]
  %v1597 = vld [vmem:[%s1 + $0x4d8] sm:$0xff]
  %v1598 = vld [vmem:[%s1 + $0x4e0] sm:$0xff]
  %v1599 = vld [vmem:[%s1 + $0x4e8] sm:$0xff]
  %v1600 = vld [vmem:[%s1 + $0x4f0] sm:$0xff]
  %v1601 = vld [vmem:[%s1 + $0x4f8] sm:$0xff]
  %v1602 = vld [vmem:[%s1 + $0x500] sm:$0xff]
  %v1603 = vld [vmem:[%s1 + $0x508] sm:$0xff]
  %v1604 = vld [vmem:[%s1 + $0x510] sm:$0xff]
  %v1605 = vld [vmem:[%s1 + $0x518] sm:$0xff]
  %v1606 = vld [vmem:[%s1 + $0x520] sm:$0xff]
  %v1607 = vld [vmem:[%s1 + $0x528] sm:$0xff]
  %v1608 = vld [vmem:[%s1 + $0x530] sm:$0xff]
  %v1609 = vld [vmem:[%s1 + $0x538] sm:$0xff]
  %v1610 = vpack.c.bf16 %v1444, %v1442
  %v1611 = vpack.c.bf16 %v1445, %v1443
  %v1612 = vpack.c.bf16 %v1448, %v1446
  %v1613 = vpack.c.bf16 %v1449, %v1447
  %v1614 = vpack.c.bf16 %v1452, %v1450
  %v1615 = vpack.c.bf16 %v1453, %v1451
  %v1616 = vpack.c.bf16 %v1456, %v1454
  %v1617 = vpack.c.bf16 %v1457, %v1455
  %v1618 = vpack.c.bf16 %v1460, %v1458
  %v1619 = vpack.c.bf16 %v1461, %v1459
  %v1620 = vpack.c.bf16 %v1464, %v1462
  %v1621 = vpack.c.bf16 %v1465, %v1463
  %v1622 = vpack.c.bf16 %v1468, %v1466
  %v1623 = vpack.c.bf16 %v1469, %v1467
  %v1624 = vpack.c.bf16 %v1472, %v1470
  %v1625 = vpack.c.bf16 %v1473, %v1471
  %v1626 = vpack.c.bf16 %v1476, %v1474
  %v1627 = vpack.c.bf16 %v1477, %v1475
  %v1628 = vpack.c.bf16 %v1480, %v1478
  %v1629 = vpack.c.bf16 %v1481, %v1479
  %v1630 = vpack.c.bf16 %v1484, %v1482
  %v1631 = vpack.c.bf16 %v1485, %v1483
  %v1632 = vpack.c.bf16 %v1488, %v1486
  %v1633 = vpack.c.bf16 %v1489, %v1487
  %v1634 = vpack.c.bf16 %v1492, %v1490
  %v1635 = vpack.c.bf16 %v1493, %v1491
  %v1636 = vpack.c.bf16 %v1496, %v1494
  %v1637 = vpack.c.bf16 %v1497, %v1495
  %v1638 = vpack.c.bf16 %v1500, %v1498
  %v1639 = vpack.c.bf16 %v1501, %v1499
  %v1640 = vpack.c.bf16 %v1504, %v1502
  %v1641 = vpack.c.bf16 %v1505, %v1503
  %v1642 = vpack.c.bf16 %v1508, %v1506
  %v1643 = vpack.c.bf16 %v1509, %v1507
  %v1644 = vpack.c.bf16 %v1512, %v1510
  %v1645 = vpack.c.bf16 %v1513, %v1511
  %v1646 = vpack.c.bf16 %v1516, %v1514
  %v1647 = vpack.c.bf16 %v1517, %v1515
  %v1648 = vpack.c.bf16 %v1520, %v1518
  %v1649 = vpack.c.bf16 %v1521, %v1519
  %v1650 = vpack.c.bf16 %v1524, %v1522
  %v1651 = vpack.c.bf16 %v1525, %v1523
  %v1652 = vpack.c.bf16 %v1528, %v1526
  %v1653 = vpack.c.bf16 %v1529, %v1527
  %v1654 = vpack.c.bf16 %v1532, %v1530
  %v1655 = vpack.c.bf16 %v1533, %v1531
  %v1656 = vpack.c.bf16 %v1536, %v1534
  %v1657 = vpack.c.bf16 %v1537, %v1535
  %v1658 = vpack.c.bf16 %v1540, %v1538
  %v1659 = vpack.c.bf16 %v1541, %v1539
  %v1660 = vpack.c.bf16 %v1544, %v1542
  %v1661 = vpack.c.bf16 %v1545, %v1543
  %v1662 = vpack.c.bf16 %v1548, %v1546
  %v1663 = vpack.c.bf16 %v1549, %v1547
  %v1664 = vpack.c.bf16 %v1552, %v1550
  %v1665 = vpack.c.bf16 %v1553, %v1551
  %v1666 = vpack.c.bf16 %v1556, %v1554
  %v1667 = vpack.c.bf16 %v1557, %v1555
  %v1668 = vpack.c.bf16 %v1560, %v1558
  %v1669 = vpack.c.bf16 %v1561, %v1559
  %v1670 = vpack.c.bf16 %v1564, %v1562
  %v1671 = vpack.c.bf16 %v1565, %v1563
  %v1672 = vpack.c.bf16 %v1568, %v1566
  %v1673 = vpack.c.bf16 %v1569, %v1567
  %v1674 = vpack.c.bf16 %v1572, %v1570
  %v1675 = vpack.c.bf16 %v1573, %v1571
  %v1676 = vpack.c.bf16 %v1576, %v1574
  %v1677 = vpack.c.bf16 %v1577, %v1575
  %v1678 = vpack.c.bf16 %v1580, %v1578
  %v1679 = vpack.c.bf16 %v1581, %v1579
  %v1680 = vpack.c.bf16 %v1584, %v1582
  %v1681 = vpack.c.bf16 %v1585, %v1583
  %v1682 = vpack.c.bf16 %v1588, %v1586
  %v1683 = vpack.c.bf16 %v1589, %v1587
  %v1684 = vpack.c.bf16 %v1592, %v1590
  %v1685 = vpack.c.bf16 %v1593, %v1591
  %v1686 = vpack.c.bf16 %v1596, %v1594
  %v1687 = vpack.c.bf16 %v1597, %v1595
  %v1688 = vpack.c.bf16 %v1600, %v1598
  %v1689 = vpack.c.bf16 %v1601, %v1599
  %v1690 = vpack.c.bf16 %v1604, %v1602
  %v1691 = vpack.c.bf16 %v1605, %v1603
  %v1692 = vpack.c.bf16 %v1608, %v1606
  %v1693 = vpack.c.bf16 %v1609, %v1607
  %v1736 = vunpack.c.l.b16 %v1400
  %v1737 = vunpack.c.h.b16 %v1400
  %v1738 = vunpack.c.l.b16 %v1401
  %v1739 = vunpack.c.h.b16 %v1401
  %v1740 = vunpack.c.l.b16 %v1402
  %v1741 = vunpack.c.h.b16 %v1402
  %v1742 = vunpack.c.l.b16 %v1403
  %v1743 = vunpack.c.h.b16 %v1403
  %v1744 = vunpack.c.l.b16 %v1404
  %v1745 = vunpack.c.h.b16 %v1404
  %v1746 = vunpack.c.l.b16 %v1405
  %v1747 = vunpack.c.h.b16 %v1405
  %v1748 = vunpack.c.l.b16 %v1406
  %v1749 = vunpack.c.h.b16 %v1406
  %v1750 = vunpack.c.l.b16 %v1407
  %v1751 = vunpack.c.h.b16 %v1407
  %v1752 = vunpack.c.l.b16 %v1408
  %v1753 = vunpack.c.h.b16 %v1408
  %v1754 = vunpack.c.l.b16 %v1409
  %v1755 = vunpack.c.h.b16 %v1409
  %v1756 = vunpack.c.l.b16 %v1410
  %v1757 = vunpack.c.h.b16 %v1410
  %v1758 = vunpack.c.l.b16 %v1411
  %v1759 = vunpack.c.h.b16 %v1411
  %v1760 = vunpack.c.l.b16 %v1412
  %v1761 = vunpack.c.h.b16 %v1412
  %v1762 = vunpack.c.l.b16 %v1413
  %v1763 = vunpack.c.h.b16 %v1413
  %v1764 = vunpack.c.l.b16 %v1414
  %v1765 = vunpack.c.h.b16 %v1414
  %v1766 = vunpack.c.l.b16 %v1415
  %v1767 = vunpack.c.h.b16 %v1415
  %v1768 = vunpack.c.l.b16 %v1416
  %v1769 = vunpack.c.h.b16 %v1416
  %v1770 = vunpack.c.l.b16 %v1417
  %v1771 = vunpack.c.h.b16 %v1417
  %v1772 = vunpack.c.l.b16 %v1418
  %v1773 = vunpack.c.h.b16 %v1418
  %v1774 = vunpack.c.l.b16 %v1419
  %v1775 = vunpack.c.h.b16 %v1419
  %v1776 = vunpack.c.l.b16 %v1420
  %v1777 = vunpack.c.h.b16 %v1420
  %v1778 = vunpack.c.l.b16 %v1421
  %v1779 = vunpack.c.h.b16 %v1421
  %v1780 = vunpack.c.l.b16 %v1422
  %v1781 = vunpack.c.h.b16 %v1422
  %v1782 = vunpack.c.l.b16 %v1423
  %v1783 = vunpack.c.h.b16 %v1423
  %v1784 = vunpack.c.l.b16 %v1424
  %v1785 = vunpack.c.h.b16 %v1424
  %v1786 = vunpack.c.l.b16 %v1425
  %v1787 = vunpack.c.h.b16 %v1425
  %v1788 = vunpack.c.l.b16 %v1426
  %v1789 = vunpack.c.h.b16 %v1426
  %v1790 = vunpack.c.l.b16 %v1427
  %v1791 = vunpack.c.h.b16 %v1427
  %v1792 = vunpack.c.l.b16 %v1428
  %v1793 = vunpack.c.h.b16 %v1428
  %v1794 = vunpack.c.l.b16 %v1429
  %v1795 = vunpack.c.h.b16 %v1429
  %v1796 = vunpack.c.l.b16 %v1430
  %v1797 = vunpack.c.h.b16 %v1430
  %v1798 = vunpack.c.l.b16 %v1431
  %v1799 = vunpack.c.h.b16 %v1431
  %v1800 = vunpack.c.l.b16 %v1432
  %v1801 = vunpack.c.h.b16 %v1432
  %v1802 = vunpack.c.l.b16 %v1433
  %v1803 = vunpack.c.h.b16 %v1433
  %v1804 = vunpack.c.l.b16 %v1434
  %v1805 = vunpack.c.h.b16 %v1434
  %v1806 = vunpack.c.l.b16 %v1435
  %v1807 = vunpack.c.h.b16 %v1435
  %v1808 = vunpack.c.l.b16 %v1436
  %v1809 = vunpack.c.h.b16 %v1436
  %v1810 = vunpack.c.l.b16 %v1437
  %v1811 = vunpack.c.h.b16 %v1437
  %v1812 = vunpack.c.l.b16 %v1438
  %v1813 = vunpack.c.h.b16 %v1438
  %v1814 = vunpack.c.l.b16 %v1439
  %v1815 = vunpack.c.h.b16 %v1439
  %v1816 = vunpack.c.l.b16 %v1440
  %v1817 = vunpack.c.h.b16 %v1440
  %v1818 = vunpack.c.l.b16 %v1441
  %v1819 = vunpack.c.h.b16 %v1441
  %v1820 = vpack.c.b16 %v1742, %v1736
  %v1821 = vpack.c.b16 %v1743, %v1737
  %v1822 = vpack.c.b16 %v1744, %v1738
  %v1823 = vpack.c.b16 %v1745, %v1739
  %v1824 = vpack.c.b16 %v1746, %v1740
  %v1825 = vpack.c.b16 %v1747, %v1741
  %v1826 = vpack.c.b16 %v1754, %v1748
  %v1827 = vpack.c.b16 %v1755, %v1749
  %v1828 = vpack.c.b16 %v1756, %v1750
  %v1829 = vpack.c.b16 %v1757, %v1751
  %v1830 = vpack.c.b16 %v1758, %v1752
  %v1831 = vpack.c.b16 %v1759, %v1753
  %v1832 = vpack.c.b16 %v1766, %v1760
  %v1833 = vpack.c.b16 %v1767, %v1761
  %v1834 = vpack.c.b16 %v1768, %v1762
  %v1835 = vpack.c.b16 %v1769, %v1763
  %v1836 = vpack.c.b16 %v1770, %v1764
  %v1837 = vpack.c.b16 %v1771, %v1765
  %v1838 = vpack.c.b16 %v1778, %v1772
  %v1839 = vpack.c.b16 %v1779, %v1773
  %v1840 = vpack.c.b16 %v1780, %v1774
  %v1841 = vpack.c.b16 %v1781, %v1775
  %v1842 = vpack.c.b16 %v1782, %v1776
  %v1843 = vpack.c.b16 %v1783, %v1777
  %v1844 = vpack.c.b16 %v1790, %v1784
  %v1845 = vpack.c.b16 %v1791, %v1785
  %v1846 = vpack.c.b16 %v1792, %v1786
  %v1847 = vpack.c.b16 %v1793, %v1787
  %v1848 = vpack.c.b16 %v1794, %v1788
  %v1849 = vpack.c.b16 %v1795, %v1789
  %v1850 = vpack.c.b16 %v1802, %v1796
  %v1851 = vpack.c.b16 %v1803, %v1797
  %v1852 = vpack.c.b16 %v1804, %v1798
  %v1853 = vpack.c.b16 %v1805, %v1799
  %v1854 = vpack.c.b16 %v1806, %v1800
  %v1855 = vpack.c.b16 %v1807, %v1801
  %v1856 = vpack.c.b16 %v1814, %v1808
  %v1857 = vpack.c.b16 %v1815, %v1809
  %v1858 = vpack.c.b16 %v1816, %v1810
  %v1859 = vpack.c.b16 %v1817, %v1811
  %v1860 = vpack.c.b16 %v1818, %v1812
  %v1861 = vpack.c.b16 %v1819, %v1813
  %v1898 = vsel %vm581, %v1825, 0
  %v1901 = vsel %vm581, %v1831, 0
  %v1904 = vsel %vm581, %v1837, 0
  %v1907 = vsel %vm581, %v1843, 0
  %v1910 = vsel %vm581, %v1849, 0
  %v1913 = vsel %vm581, %v1855, 0
  %v1916 = vsel %vm581, %v1861, 0
  %1918 = vmatprep.subr.bf16.mxu0 %v1611
  %1919 = vmatpush1.bf16.msra.mxu0 %v1610
  %1920 = vmatprep.subr.bf16.mxu0 %v1613
  %1921 = vmatpush1.bf16.msra.mxu0 %v1612
  %1922 = vmatprep.subr.bf16.mxu0 %v1615
  %1923 = vmatpush1.bf16.msra.mxu0 %v1614
  %1924 = vmatprep.subr.bf16.mxu0 %v1617
  %1925 = vmatpush1.bf16.msra.mxu0 %v1616
  %1926 = vmatprep.subr.bf16.mxu0 %v1619
  %1927 = vmatpush1.bf16.msra.mxu0 %v1618
  %1928 = vmatprep.subr.bf16.mxu0 %v1621
  %1929 = vmatpush1.bf16.msra.mxu0 %v1620
  %1930 = vmatprep.subr.bf16.mxu0 %v1623
  %1931 = vmatpush1.bf16.msra.mxu0 %v1622
  %1932 = vmatprep.subr.bf16.mxu0 %v1625
  %1933 = vmatpush1.bf16.msra.mxu0 %v1624
  %1934 = vmatprep.subr.bf16.mxu0 %v1627
  %1935 = vmatpush1.bf16.msra.mxu0 %v1626
  %1936 = vmatprep.subr.bf16.mxu0 %v1629
  %1937 = vmatpush1.bf16.msra.mxu0 %v1628
  %1938 = vmatprep.subr.bf16.mxu0 %v1631
  %1939 = vmatpush1.bf16.msra.mxu0 %v1630
  %1940 = vmatprep.subr.bf16.mxu0 %v1633
  %1941 = vmatpush1.bf16.msra.mxu0 %v1632
  %1942 = vmatprep.subr.bf16.mxu0 %v1635
  %1943 = vmatpush1.bf16.msra.mxu0 %v1634
  %1944 = vmatprep.subr.bf16.mxu0 %v1637
  %1945 = vmatpush1.bf16.msra.mxu0 %v1636
  %1946 = vmatprep.subr.bf16.mxu0 %v1639
  %1947 = vmatpush1.bf16.msra.mxu0 %v1638
  %1948 = vmatprep.subr.bf16.mxu0 %v1641
  %1949 = vmatpush1.bf16.msra.mxu0 %v1640
  %1950 = vmatprep.mubr.bf16.mxu0 %v1821
  %1951 = vmatmul.mubr.bf16.gmra.mrb[0].mxu0 %v1820
  %v1952 = vpop.f32.mrb[0].mxu0
  %v1953 = vadd.f32 0.0, %v1952
  %v1954 = vpop.f32.mrb[0].mxu0
  %v1955 = vadd.f32 0.0, %v1954
  %v1956 = vpop.f32.mrb[0].mxu0
  %v1957 = vadd.f32 0.0, %v1956
  %v1958 = vpop.f32.mrb[0].mxu0
  %v1959 = vadd.f32 0.0, %v1958
  %1960 = vmatprep.mubr.bf16.mxu0 %v1827
  %1961 = vmatmul.mubr.bf16.gmra.mrb[0].mxu0 %v1826
  %v1962 = vpop.f32.mrb[0].mxu0
  %v1963 = vadd.f32 0.0, %v1962
  %v1964 = vpop.f32.mrb[0].mxu0
  %v1965 = vadd.f32 0.0, %v1964
  %v1966 = vpop.f32.mrb[0].mxu0
  %v1967 = vadd.f32 0.0, %v1966
  %v1968 = vpop.f32.mrb[0].mxu0
  %v1969 = vadd.f32 0.0, %v1968
  %1970 = vmatprep.mubr.bf16.mxu0 %v1833
  %1971 = vmatmul.mubr.bf16.gmra.mrb[0].mxu0 %v1832
  %v1972 = vpop.f32.mrb[0].mxu0
  %v1973 = vadd.f32 0.0, %v1972
  %v1974 = vpop.f32.mrb[0].mxu0
  %v1975 = vadd.f32 0.0, %v1974
  %v1976 = vpop.f32.mrb[0].mxu0
  %v1977 = vadd.f32 0.0, %v1976
  %v1978 = vpop.f32.mrb[0].mxu0
  %v1979 = vadd.f32 0.0, %v1978
  %1980 = vmatprep.mubr.bf16.mxu0 %v1839
  %1981 = vmatmul.mubr.bf16.gmra.mrb[0].mxu0 %v1838
  %v1982 = vpop.f32.mrb[0].mxu0
  %v1983 = vadd.f32 0.0, %v1982
  %v1984 = vpop.f32.mrb[0].mxu0
  %v1985 = vadd.f32 0.0, %v1984
  %v1986 = vpop.f32.mrb[0].mxu0
  %v1987 = vadd.f32 0.0, %v1986
  %v1988 = vpop.f32.mrb[0].mxu0
  %v1989 = vadd.f32 0.0, %v1988
  %1990 = vmatprep.mubr.bf16.mxu0 %v1845
  %1991 = vmatmul.mubr.bf16.gmra.mrb[0].mxu0 %v1844
  %v1992 = vpop.f32.mrb[0].mxu0
  %v1993 = vadd.f32 0.0, %v1992
  %v1994 = vpop.f32.mrb[0].mxu0
  %v1995 = vadd.f32 0.0, %v1994
  %v1996 = vpop.f32.mrb[0].mxu0
  %v1997 = vadd.f32 0.0, %v1996
  %v1998 = vpop.f32.mrb[0].mxu0
  %v1999 = vadd.f32 0.0, %v1998
  %2000 = vmatprep.mubr.bf16.mxu0 %v1851
  %2001 = vmatmul.mubr.bf16.gmra.mrb[0].mxu0 %v1850
  %v2002 = vpop.f32.mrb[0].mxu0
  %v2003 = vadd.f32 0.0, %v2002
  %v2004 = vpop.f32.mrb[0].mxu0
  %v2005 = vadd.f32 0.0, %v2004
  %v2006 = vpop.f32.mrb[0].mxu0
  %v2007 = vadd.f32 0.0, %v2006
  %v2008 = vpop.f32.mrb[0].mxu0
  %v2009 = vadd.f32 0.0, %v2008
  %2010 = vmatprep.mubr.bf16.mxu0 %v1857
  %2011 = vmatmul.mubr.bf16.gmra.mrb[0].mxu0 %v1856
  %v2012 = vpop.f32.mrb[0].mxu0
  %v2013 = vadd.f32 0.0, %v2012
  %v2014 = vpop.f32.mrb[0].mxu0
  %v2015 = vadd.f32 0.0, %v2014
  %v2016 = vpop.f32.mrb[0].mxu0
  %v2017 = vadd.f32 0.0, %v2016
  %v2018 = vpop.f32.mrb[0].mxu0
  %v2019 = vadd.f32 0.0, %v2018
  %2020 = vdwg.mxu0
  %2021 = vmatprep.subr.bf16.mxu0 %v1643
  %2022 = vmatpush1.bf16.msra.mxu0 %v1642
  %2023 = vmatprep.subr.bf16.mxu0 %v1645
  %2024 = vmatpush1.bf16.msra.mxu0 %v1644
  %2025 = vmatprep.subr.bf16.mxu0 %v1647
  %2026 = vmatpush1.bf16.msra.mxu0 %v1646
  %2027 = vmatprep.subr.bf16.mxu0 %v1649
  %2028 = vmatpush1.bf16.msra.mxu0 %v1648
  %2029 = vmatprep.subr.bf16.mxu0 %v1651
  %2030 = vmatpush1.bf16.msra.mxu0 %v1650
  %2031 = vmatprep.subr.bf16.mxu0 %v1653
  %2032 = vmatpush1.bf16.msra.mxu0 %v1652
  %2033 = vmatprep.subr.bf16.mxu0 %v1655
  %2034 = vmatpush1.bf16.msra.mxu0 %v1654
  %2035 = vmatprep.subr.bf16.mxu0 %v1657
  %2036 = vmatpush1.bf16.msra.mxu0 %v1656
  %2037 = vmatprep.subr.bf16.mxu0 %v1659
  %2038 = vmatpush1.bf16.msra.mxu0 %v1658
  %2039 = vmatprep.subr.bf16.mxu0 %v1661
  %2040 = vmatpush1.bf16.msra.mxu0 %v1660
  %2041 = vmatprep.subr.bf16.mxu0 %v1663
  %2042 = vmatpush1.bf16.msra.mxu0 %v1662
  %2043 = vmatprep.subr.bf16.mxu0 %v1665
  %2044 = vmatpush1.bf16.msra.mxu0 %v1664
  %2045 = vmatprep.subr.bf16.mxu0 %v1667
  %2046 = vmatpush1.bf16.msra.mxu0 %v1666
  %2047 = vmatprep.subr.bf16.mxu0 %v1669
  %2048 = vmatpush1.bf16.msra.mxu0 %v1668
  %2049 = vmatprep.subr.bf16.mxu0 %v1671
  %2050 = vmatpush1.bf16.msra.mxu0 %v1670
  %2051 = vmatprep.subr.bf16.mxu0 %v1673
  %2052 = vmatpush1.bf16.msra.mxu0 %v1672
  %2053 = vmatprep.mubr.bf16.mxu0 %v1823
  %2054 = vmatmul.mubr.bf16.gmra.mrb[0].mxu0 %v1822
  %v2055 = vpop.f32.mrb[0].mxu0
  %v2056 = vadd.f32 %v1953, %v2055
  %v2057 = vpop.f32.mrb[0].mxu0
  %v2058 = vadd.f32 %v1955, %v2057
  %v2059 = vpop.f32.mrb[0].mxu0
  %v2060 = vadd.f32 %v1957, %v2059
  %v2061 = vpop.f32.mrb[0].mxu0
  %v2062 = vadd.f32 %v1959, %v2061
  %2063 = vmatprep.mubr.bf16.mxu0 %v1829
  %2064 = vmatmul.mubr.bf16.gmra.mrb[0].mxu0 %v1828
  %v2065 = vpop.f32.mrb[0].mxu0
  %v2066 = vadd.f32 %v1963, %v2065
  %v2067 = vpop.f32.mrb[0].mxu0
  %v2068 = vadd.f32 %v1965, %v2067
  %v2069 = vpop.f32.mrb[0].mxu0
  %v2070 = vadd.f32 %v1967, %v2069
  %v2071 = vpop.f32.mrb[0].mxu0
  %v2072 = vadd.f32 %v1969, %v2071
  %2073 = vmatprep.mubr.bf16.mxu0 %v1835
  %2074 = vmatmul.mubr.bf16.gmra.mrb[0].mxu0 %v1834
  %v2075 = vpop.f32.mrb[0].mxu0
  %v2076 = vadd.f32 %v1973, %v2075
  %v2077 = vpop.f32.mrb[0].mxu0
  %v2078 = vadd.f32 %v1975, %v2077
  %v2079 = vpop.f32.mrb[0].mxu0
  %v2080 = vadd.f32 %v1977, %v2079
  %v2081 = vpop.f32.mrb[0].mxu0
  %v2082 = vadd.f32 %v1979, %v2081
  %2083 = vmatprep.mubr.bf16.mxu0 %v1841
  %2084 = vmatmul.mubr.bf16.gmra.mrb[0].mxu0 %v1840
  %v2085 = vpop.f32.mrb[0].mxu0
  %v2086 = vadd.f32 %v1983, %v2085
  %v2087 = vpop.f32.mrb[0].mxu0
  %v2088 = vadd.f32 %v1985, %v2087
  %v2089 = vpop.f32.mrb[0].mxu0
  %v2090 = vadd.f32 %v1987, %v2089
  %v2091 = vpop.f32.mrb[0].mxu0
  %v2092 = vadd.f32 %v1989, %v2091
  %2093 = vmatprep.mubr.bf16.mxu0 %v1847
  %2094 = vmatmul.mubr.bf16.gmra.mrb[0].mxu0 %v1846
  %v2095 = vpop.f32.mrb[0].mxu0
  %v2096 = vadd.f32 %v1993, %v2095
  %v2097 = vpop.f32.mrb[0].mxu0
  %v2098 = vadd.f32 %v1995, %v2097
  %v2099 = vpop.f32.mrb[0].mxu0
  %v2100 = vadd.f32 %v1997, %v2099
  %v2101 = vpop.f32.mrb[0].mxu0
  %v2102 = vadd.f32 %v1999, %v2101
  %2103 = vmatprep.mubr.bf16.mxu0 %v1853
  %2104 = vmatmul.mubr.bf16.gmra.mrb[0].mxu0 %v1852
  %v2105 = vpop.f32.mrb[0].mxu0
  %v2106 = vadd.f32 %v2003, %v2105
  %v2107 = vpop.f32.mrb[0].mxu0
  %v2108 = vadd.f32 %v2005, %v2107
  %v2109 = vpop.f32.mrb[0].mxu0
  %v2110 = vadd.f32 %v2007, %v2109
  %v2111 = vpop.f32.mrb[0].mxu0
  %v2112 = vadd.f32 %v2009, %v2111
  %2113 = vmatprep.mubr.bf16.mxu0 %v1859
  %2114 = vmatmul.mubr.bf16.gmra.mrb[0].mxu0 %v1858
  %v2115 = vpop.f32.mrb[0].mxu0
  %v2116 = vadd.f32 %v2013, %v2115
  %v2117 = vpop.f32.mrb[0].mxu0
  %v2118 = vadd.f32 %v2015, %v2117
  %v2119 = vpop.f32.mrb[0].mxu0
  %v2120 = vadd.f32 %v2017, %v2119
  %v2121 = vpop.f32.mrb[0].mxu0
  %v2122 = vadd.f32 %v2019, %v2121
  %2123 = vdwg.mxu0
  %2124 = vmatprep.subr.bf16.mxu0 %v1675
  %2125 = vmatpush1.bf16.msra.mxu0 %v1674
  %2126 = vmatprep.subr.bf16.mxu0 %v1677
  %2127 = vmatpush1.bf16.msra.mxu0 %v1676
  %2128 = vmatprep.subr.bf16.mxu0 %v1679
  %2129 = vmatpush1.bf16.msra.mxu0 %v1678
  %2130 = vmatprep.subr.bf16.mxu0 %v1681
  %2131 = vmatpush1.bf16.msra.mxu0 %v1680
  %2132 = vmatprep.subr.bf16.mxu0 %v1683
  %2133 = vmatpush1.bf16.msra.mxu0 %v1682
  %2134 = vmatprep.subr.bf16.mxu0 %v1685
  %2135 = vmatpush1.bf16.msra.mxu0 %v1684
  %2136 = vmatprep.subr.bf16.mxu0 %v1687
  %2137 = vmatpush1.bf16.msra.mxu0 %v1686
  %2138 = vmatprep.subr.bf16.mxu0 %v1689
  %2139 = vmatpush1.bf16.msra.mxu0 %v1688
  %2140 = vmatprep.subr.bf16.mxu0 %v1691
  %2141 = vmatpush1.bf16.msra.mxu0 %v1690
  %2142 = vmatprep.subr.bf16.mxu0 %v1693
  %2143 = vmatpush1.bf16.msra.mxu0 %v1692
  %2144 = vmatprep.subr.bf16.mxu0 0
  %2145 = vmatpush1.bf16.msra.mxu0 0
  %2146 = vmatprep.subr.bf16.mxu0 0
  %2147 = vmatpush1.bf16.msra.mxu0 0
  %2148 = vmatprep.subr.bf16.mxu0 0
  %2149 = vmatpush1.bf16.msra.mxu0 0
  %2150 = vmatprep.subr.bf16.mxu0 0
  %2151 = vmatpush1.bf16.msra.mxu0 0
  %2152 = vmatprep.subr.bf16.mxu0 0
  %2153 = vmatpush1.bf16.msra.mxu0 0
  %2154 = vmatprep.subr.bf16.mxu0 0
  %2155 = vmatpush1.bf16.msra.mxu0 0
  %2156 = vmatprep.mubr.bf16.mxu0 %v1898
  %2157 = vmatmul.mubr.bf16.gmra.mrb[0].mxu0 %v1824
  %v2158 = vpop.f32.mrb[0].mxu0
  %v2159 = vadd.f32 %v2056, %v2158
  %v2160 = vpop.f32.mrb[0].mxu0
  %v2161 = vadd.f32 %v2058, %v2160
  %v2162 = vpop.f32.mrb[0].mxu0
  %v2163 = vadd.f32 %v2060, %v2162
  %v2164 = vpop.f32.mrb[0].mxu0
  %v2165 = vadd.f32 %v2062, %v2164
  %2166 = vmatprep.mubr.bf16.mxu0 %v1901
  %2167 = vmatmul.mubr.bf16.gmra.mrb[0].mxu0 %v1830
  %v2168 = vpop.f32.mrb[0].mxu0
  %v2169 = vadd.f32 %v2066, %v2168
  %v2170 = vpop.f32.mrb[0].mxu0
  %v2171 = vadd.f32 %v2068, %v2170
  %v2172 = vpop.f32.mrb[0].mxu0
  %v2173 = vadd.f32 %v2070, %v2172
  %v2174 = vpop.f32.mrb[0].mxu0
  %v2175 = vadd.f32 %v2072, %v2174
  %2176 = vmatprep.mubr.bf16.mxu0 %v1904
  %2177 = vmatmul.mubr.bf16.gmra.mrb[0].mxu0 %v1836
  %v2178 = vpop.f32.mrb[0].mxu0
  %v2179 = vadd.f32 %v2076, %v2178
  %v2180 = vpop.f32.mrb[0].mxu0
  %v2181 = vadd.f32 %v2078, %v2180
  %v2182 = vpop.f32.mrb[0].mxu0
  %v2183 = vadd.f32 %v2080, %v2182
  %v2184 = vpop.f32.mrb[0].mxu0
  %v2185 = vadd.f32 %v2082, %v2184
  %2186 = vmatprep.mubr.bf16.mxu0 %v1907
  %2187 = vmatmul.mubr.bf16.gmra.mrb[0].mxu0 %v1842
  %v2188 = vpop.f32.mrb[0].mxu0
  %v2189 = vadd.f32 %v2086, %v2188
  %v2190 = vpop.f32.mrb[0].mxu0
  %v2191 = vadd.f32 %v2088, %v2190
  %v2192 = vpop.f32.mrb[0].mxu0
  %v2193 = vadd.f32 %v2090, %v2192
  %v2194 = vpop.f32.mrb[0].mxu0
  %v2195 = vadd.f32 %v2092, %v2194
  %2196 = vmatprep.mubr.bf16.mxu0 %v1910
  %2197 = vmatmul.mubr.bf16.gmra.mrb[0].mxu0 %v1848
  %v2198 = vpop.f32.mrb[0].mxu0
  %v2199 = vadd.f32 %v2096, %v2198
  %v2200 = vpop.f32.mrb[0].mxu0
  %v2201 = vadd.f32 %v2098, %v2200
  %v2202 = vpop.f32.mrb[0].mxu0
  %v2203 = vadd.f32 %v2100, %v2202
  %v2204 = vpop.f32.mrb[0].mxu0
  %v2205 = vadd.f32 %v2102, %v2204
  %2206 = vmatprep.mubr.bf16.mxu0 %v1913
  %2207 = vmatmul.mubr.bf16.gmra.mrb[0].mxu0 %v1854
  %v2208 = vpop.f32.mrb[0].mxu0
  %v2209 = vadd.f32 %v2106, %v2208
  %v2210 = vpop.f32.mrb[0].mxu0
  %v2211 = vadd.f32 %v2108, %v2210
  %v2212 = vpop.f32.mrb[0].mxu0
  %v2213 = vadd.f32 %v2110, %v2212
  %v2214 = vpop.f32.mrb[0].mxu0
  %v2215 = vadd.f32 %v2112, %v2214
  %2216 = vmatprep.mubr.bf16.mxu0 %v1916
  %2217 = vmatmul.mubr.bf16.gmra.mrb[0].mxu0 %v1860
  %v2218 = vpop.f32.mrb[0].mxu0
  %v2219 = vadd.f32 %v2116, %v2218
  %v2220 = vpop.f32.mrb[0].mxu0
  %v2221 = vadd.f32 %v2118, %v2220
  %v2222 = vpop.f32.mrb[0].mxu0
  %v2223 = vadd.f32 %v2120, %v2222
  %v2224 = vpop.f32.mrb[0].mxu0
  %v2225 = vadd.f32 %v2122, %v2224
  %2226 = vdwg.mxu0
  %2227 = vst [vmem:[%s7] sm:$0xff] %v2159
  %vm2228 = vcmask 556032
  %2229 = vst.msk [vmem:[%s7 + $0x8] sm:$0xff] %vm2228, %v2161
  %2230 = vst [vmem:[%s7 + $0x10] sm:$0xff] %v2163
  %2231 = vst.msk [vmem:[%s7 + $0x18] sm:$0xff] %vm2228, %v2165
  %2232 = vst [vmem:[%s7 + $0x20] sm:$0xff] %v2169
  %2233 = vst.msk [vmem:[%s7 + $0x28] sm:$0xff] %vm2228, %v2171
  %2234 = vst [vmem:[%s7 + $0x30] sm:$0xff] %v2173
  %2235 = vst.msk [vmem:[%s7 + $0x38] sm:$0xff] %vm2228, %v2175
  %2236 = vst [vmem:[%s7 + $0x40] sm:$0xff] %v2179
  %2237 = vst.msk [vmem:[%s7 + $0x48] sm:$0xff] %vm2228, %v2181
  %2238 = vst [vmem:[%s7 + $0x50] sm:$0xff] %v2183
  %2239 = vst.msk [vmem:[%s7 + $0x58] sm:$0xff] %vm2228, %v2185
  %2240 = vst [vmem:[%s7 + $0x60] sm:$0xff] %v2189
  %2241 = vst.msk [vmem:[%s7 + $0x68] sm:$0xff] %vm2228, %v2191
  %2242 = vst [vmem:[%s7 + $0x70] sm:$0xff] %v2193
  %2243 = vst.msk [vmem:[%s7 + $0x78] sm:$0xff] %vm2228, %v2195
  %2244 = vst [vmem:[%s7 + $0x80] sm:$0xff] %v2199
  %2245 = vst.msk [vmem:[%s7 + $0x88] sm:$0xff] %vm2228, %v2201
  %2246 = vst [vmem:[%s7 + $0x90] sm:$0xff] %v2203
  %2247 = vst.msk [vmem:[%s7 + $0x98] sm:$0xff] %vm2228, %v2205
  %2248 = vst [vmem:[%s7 + $0xa0] sm:$0xff] %v2209
  %2249 = vst.msk [vmem:[%s7 + $0xa8] sm:$0xff] %vm2228, %v2211
  %2250 = vst [vmem:[%s7 + $0xb0] sm:$0xff] %v2213
  %2251 = vst.msk [vmem:[%s7 + $0xb8] sm:$0xff] %vm2228, %v2215
  %2252 = vst [vmem:[%s7 + $0xc0] sm:$0xff] %v2219
  %2253 = vst.msk [vmem:[%s7 + $0xc8] sm:$0xff] %vm2228, %v2221
  %2254 = vst [vmem:[%s7 + $0xd0] sm:$0xff] %v2223
  %2255 = vst.msk [vmem:[%s7 + $0xd8] sm:$0xff] %vm2228, %v2225
  // Predicated region
  $region30: #{tpu_custom_call.1} parent=0 // pred_check
    _
  $region31: #{tpu_custom_call.1} parent=0 // pred_check_branch
    %2257 = sbr.rel (0) target = $region33
  $region32: #{tpu_custom_call.1} parent=0 // pred_region
    _
  $region33: #{tpu_custom_call.1} parent=0 // pred_fallthru
    _
  // Predicated region
  $region34: #{tpu_custom_call.1} parent=0 // pred_check
    _
  $region35: #{tpu_custom_call.1} parent=0 // pred_check_branch
    %2259 = sbr.rel (0) target = $region37
  $region36: #{tpu_custom_call.1} parent=0 // pred_region
    _
  $region37: #{tpu_custom_call.1} parent=0 // pred_fallthru
    _

</llo_original>
